<compile_context>
chip_gen: v7x
topology: tpu7x:2x2x1
jax: 0.10.0
libtpu: 0.0.40
codegen_flags: <defaults>
</compile_context>

<pallas_src>
import functools

import jax
import jax.numpy as jnp
import numpy as np
from jax.experimental import pallas as pl
from jax.experimental.pallas import tpu as pltpu


def _mhpda_kernel(x_ref, w_ref, wq_ref, wk_ref, wv_ref, wp_ref, bp_ref, o_ref,
                  *, num_heads, head_dim):
    # x_ref : (1, C_Q, TQ)  query tokens (channel-major, current query tile)
    # w_ref : (1, C_KV, N)  key/value tokens (channel-major, all tokens)
    # wq_ref: (C_Q, C_Q)    bf16, softmax scale pre-folded
    # wk_ref: (C_Q, C_KV)   bf16
    # wv_ref: (C_Q, C_KV)   bf16
    # wp_ref: (C_Q, C_Q)    bf16
    # bp_ref: (C_Q, 1)      f32
    # o_ref : (1, C_Q, TQ)
    f32 = jnp.float32
    bf16 = jnp.bfloat16

    xq = x_ref[0].astype(bf16)            # (C_Q, TQ)
    xkv = w_ref[0].astype(bf16)           # (C_KV, N)

    # Projections, channel-major: out = W @ x (contraction over input channels).
    q = jnp.dot(wq_ref[...], xq, preferred_element_type=f32)    # (C_Q, TQ)
    k = jnp.dot(wk_ref[...], xkv, preferred_element_type=f32)   # (C_Q, N)
    v = jnp.dot(wv_ref[...], xkv, preferred_element_type=f32)   # (C_Q, N)

    tq = q.shape[-1]
    n = k.shape[-1]
    qh = q.astype(bf16).reshape(num_heads, head_dim, tq)        # (H, d, TQ)
    kh = k.astype(bf16).reshape(num_heads, head_dim, n)         # (H, d, N)
    vh = v.astype(bf16).reshape(num_heads, head_dim, n)         # (H, d, N)

    # Scores with keys on the sublane axis: s_t[h, m, nq] = k_m . q_nq
    # (softmax scale already folded into Wq on the host).
    s_t = jax.lax.dot_general(
        kh, qh, dimension_numbers=(((1,), (1,)), ((0,), (0,))),
        preferred_element_type=f32)                              # (H, N, TQ)

    # Softmax over keys (axis -2), f32; reciprocal on the EUP slot.
    s_t = s_t - jnp.max(s_t, axis=-2, keepdims=True)
    p = jnp.exp(s_t)
    denom = jnp.sum(p, axis=-2, keepdims=True)                   # (H, 1, TQ)
    p = (p * pl.reciprocal(denom, approx=True)).astype(bf16)

    # Context, channel-major (canonical MXU orientation, no transposes):
    # ctx[h, d, nq] = sum_m v[h, d, m] * p[h, m, nq]
    ctx = jax.lax.dot_general(
        vh, p, dimension_numbers=(((2,), (1,)), ((0,), (0,))),
        preferred_element_type=f32)                              # (H, d, TQ)
    ctx = ctx.reshape(num_heads * head_dim, tq).astype(bf16)     # (C_Q, TQ)

    out = jnp.dot(wp_ref[...], ctx, preferred_element_type=f32)  # (C_Q, TQ)
    out = out + bp_ref[...]                                      # bias (C_Q, 1)
    o_ref[0] = out.astype(o_ref.dtype)


def mhpda_forward(x, w, params, *, num_heads, tq=None):
    """x: (b, c_q, H, W) NCHW; w: (b, c_kv, H, W) NCHW (same spatial size)."""
    b, c_q, h_sp, w_sp = x.shape
    _, c_kv, h_k, w_k = w.shape
    n = h_sp * w_sp
    assert h_k * w_k == n, "reference module requires n_k == n_q"
    assert c_q % num_heads == 0, "q_dim must be divisible by num_heads"
    head_dim = c_q // num_heads
    scale = head_dim ** (-0.5)

    # Channel-major (b, c, n): pure reshapes, no HBM transpose passes.
    x_cm = x.reshape(b, c_q, n)
    w_cm = w.reshape(b, c_kv, n)

    # Query tile: multiple of 128 lanes (or full extent).
    if tq is None:
        tq = 512
    tq = min(tq, n)
    if n % tq != 0 or (tq % 128 != 0 and tq != n):
        tq = n
    n_q_tiles = n // tq

    # PyTorch Linear weights are (out, in); channel-major kernel computes W @ X
    # so keep that orientation.  Fold the softmax scale into Wq and pre-cast
    # weights to bf16 (MXU-native); accumulation stays f32 inside the kernel.
    wq_s = (params["wq"] * scale).astype(jnp.bfloat16)   # (c_q,  c_q)
    wk_b = params["wk"].astype(jnp.bfloat16)             # (c_q,  c_kv)
    wv_b = params["wv"].astype(jnp.bfloat16)             # (c_q,  c_kv)
    wp_b = params["wp"].astype(jnp.bfloat16)             # (c_q,  c_q)
    bp = params["bp"].reshape(c_q, 1).astype(jnp.float32)

    kernel = functools.partial(
        _mhpda_kernel, num_heads=num_heads, head_dim=head_dim)

    # Explicit VMEM budget (double-buffered I/O + weights + attention
    # intermediates), with 2x headroom, clamped to [32 MiB, 64 MiB].
    est = (2 * 4 * c_q * tq            # x tile, double-buffered, f32
           + 2 * 4 * c_kv * n          # w tile
           + 2 * 4 * c_q * tq          # out tile
           + 4 * (2 * c_q * c_q + 2 * c_q * c_kv + c_q)   # bf16 weights x2
           + 2 * (c_q * tq + 2 * c_q * n)                 # q/k/v (bf16)
           + 4 * num_heads * n * tq * 3)                  # scores/p/ctx (f32)
    vmem_limit = int(min(max(2 * est, 32 * 1024 * 1024), 64 * 1024 * 1024))

    out_cm = pl.pallas_call(
        kernel,
        out_shape=jax.ShapeDtypeStruct((b, c_q, n), x.dtype),
        grid_spec=pltpu.PrefetchScalarGridSpec(
            num_scalar_prefetch=0,
            grid=(b, n_q_tiles),
            in_specs=[
                pl.BlockSpec((1, c_q, tq), lambda i, j: (i, 0, j)),
                pl.BlockSpec((1, c_kv, n), lambda i, j: (i, 0, 0)),
                pl.BlockSpec((c_q, c_q), lambda i, j: (0, 0)),
                pl.BlockSpec((c_q, c_kv), lambda i, j: (0, 0)),
                pl.BlockSpec((c_q, c_kv), lambda i, j: (0, 0)),
                pl.BlockSpec((c_q, c_q), lambda i, j: (0, 0)),
                pl.BlockSpec((c_q, 1), lambda i, j: (0, 0)),
            ],
            out_specs=pl.BlockSpec((1, c_q, tq), lambda i, j: (i, 0, j)),
        ),
        compiler_params=pltpu.CompilerParams(
            dimension_semantics=("parallel", "parallel"),
            vmem_limit_bytes=vmem_limit),
    )(x_cm, w_cm, wq_s, wk_b, wv_b, wp_b, bp)

    # Channel-major output reshapes straight back to NCHW (free).
    return out_cm.reshape(b, c_q, h_sp, w_sp)


def mhpda_reference(x, w, params, *, num_heads):
    """Pure-JAX f32 reference mirroring the PyTorch forward (eval, p_drop=0)."""
    b, c_q, h_sp, w_sp = x.shape
    _, c_kv, _, _ = w.shape
    n = h_sp * w_sp
    head_dim = c_q // num_heads
    scale = head_dim ** (-0.5)

    xq = x.reshape(b, c_q, n).transpose(0, 2, 1)             # (b, n, c_q)
    xkv = w.reshape(b, c_kv, n).transpose(0, 2, 1)           # (b, n, c_kv)

    q = xq @ params["wq"].T
    k = xkv @ params["wk"].T
    v = xkv @ params["wv"].T

    def split(t):  # (b, n, c_q) -> (b, H, n, d)
        return t.reshape(b, n, num_heads, head_dim).transpose(0, 2, 1, 3)

    qh, kh, vh = split(q), split(k), split(v)
    attn = jnp.einsum("bhnd,bhmd->bhnm", qh, kh) * scale
    attn = jax.nn.softmax(attn, axis=-1)
    ctx = jnp.einsum("bhnm,bhmd->bhnd", attn, vh)
    ctx = ctx.transpose(0, 2, 1, 3).reshape(b, n, c_q)
    out = ctx @ params["wp"].T + params["bp"]
    return out.transpose(0, 2, 1).reshape(b, c_q, h_sp, w_sp)


def init_params(key, c_q, c_kv):
    """Deterministic PyTorch-Linear-style init: U(-1/sqrt(fan_in), 1/sqrt(fan_in))."""
    ks = jax.random.split(key, 5)

    def lin(k, out_f, in_f):
        bound = 1.0 / np.sqrt(in_f)
        return jax.random.uniform(k, (out_f, in_f), jnp.float32, -bound, bound)

    return {
        "wq": lin(ks[0], c_q, c_q),
        "wk": lin(ks[1], c_q, c_kv),
        "wv": lin(ks[2], c_q, c_kv),
        "wp": lin(ks[3], c_q, c_q),
        "bp": jax.random.uniform(ks[4], (c_q,), jnp.float32,
                                 -1.0 / np.sqrt(c_q), 1.0 / np.sqrt(c_q)),
    }


if __name__ == "__main__":
    # Small shapes: batch=2, q_dim=32, kv_dim=16, spatial=16x16 (n=256), 4 heads.
    # tq=128 -> grid (2, 2) so the query-tiling path is exercised.
    B, C_Q, C_KV, HH, WW, NUM_HEADS = 2, 32, 16, 16, 16, 4

    key = jax.random.PRNGKey(0)
    kx, kw, kp = jax.random.split(key, 3)
    x = jax.random.normal(kx, (B, C_Q, HH, WW), jnp.float32)
    w = jax.random.normal(kw, (B, C_KV, HH, WW), jnp.float32)
    params = init_params(kp, C_Q, C_KV)

    out = mhpda_forward(x, w, params, num_heads=NUM_HEADS, tq=128)
    out = jax.block_until_ready(out)

    ref = mhpda_reference(x, w, params, num_heads=NUM_HEADS)
    # bf16 matmul operands + approx reciprocal -> loosened tolerance vs f32 ref.
    np.testing.assert_allclose(np.asarray(out), np.asarray(ref),
                               rtol=2e-2, atol=2e-2)
    assert out.shape == (B, C_Q, HH, WW)
    print("KERNEL_OK")
</pallas_src>

<mosaic_0001>
module attributes {stable_mosaic.version = 11 : i64} {
  func.func @_mhpda_kernel(%arg0: i32, %arg1: i32, %arg2: memref<1x32x128xf32, #tpu.memory_space<vmem>>, %arg3: memref<1x16x256xf32, #tpu.memory_space<vmem>>, %arg4: memref<32x32xbf16, #tpu.memory_space<vmem>>, %arg5: memref<32x16xbf16, #tpu.memory_space<vmem>>, %arg6: memref<32x16xbf16, #tpu.memory_space<vmem>>, %arg7: memref<32x32xbf16, #tpu.memory_space<vmem>>, %arg8: memref<32x1xf32, #tpu.memory_space<vmem>>, %arg9: memref<1x32x128xf32, #tpu.memory_space<vmem>>) attributes {dimension_semantics = [#tpu.dimension_semantics<parallel>, #tpu.dimension_semantics<parallel>], iteration_bounds = array<i64: 2, 2>, scalar_prefetch = 0 : i64, scratch_operands = 0 : i64, tpu.core_type = #tpu.core_type<tc>, window_params = [{transform_indices = @transform_0, window_bounds = array<i64: 1, 32, 128>}, {transform_indices = @transform_1, window_bounds = array<i64: 1, 16, 256>}, {pipeline_mode = #tpu.pipeline_mode<synchronous>, transform_indices = @transform_2, window_bounds = array<i64: 32, 32>}, {pipeline_mode = #tpu.pipeline_mode<synchronous>, transform_indices = @transform_3, window_bounds = array<i64: 32, 16>}, {pipeline_mode = #tpu.pipeline_mode<synchronous>, transform_indices = @transform_4, window_bounds = array<i64: 32, 16>}, {pipeline_mode = #tpu.pipeline_mode<synchronous>, transform_indices = @transform_5, window_bounds = array<i64: 32, 32>}, {pipeline_mode = #tpu.pipeline_mode<synchronous>, transform_indices = @transform_6, window_bounds = array<i64: 32, 1>}, {transform_indices = @transform_7, window_bounds = array<i64: 1, 32, 128>}]} {
    %c0 = arith.constant 0 : index
    %c0_0 = arith.constant 0 : index
    %c0_1 = arith.constant 0 : index
    %0 = vector.load %arg2[%c0, %c0_0, %c0_1] : memref<1x32x128xf32, #tpu.memory_space<vmem>>, vector<1x32x128xf32>
    %1 = vector.shape_cast %0 : vector<1x32x128xf32> to vector<32x128xf32>
    %2 = arith.truncf %1 : vector<32x128xf32> to vector<32x128xbf16>
    %c0_2 = arith.constant 0 : index
    %c0_3 = arith.constant 0 : index
    %c0_4 = arith.constant 0 : index
    %3 = vector.load %arg3[%c0_2, %c0_3, %c0_4] : memref<1x16x256xf32, #tpu.memory_space<vmem>>, vector<1x16x256xf32>
    %4 = vector.shape_cast %3 : vector<1x16x256xf32> to vector<16x256xf32>
    %5 = arith.truncf %4 : vector<16x256xf32> to vector<16x256xbf16>
    %c0_5 = arith.constant 0 : index
    %c0_6 = arith.constant 0 : index
    %6 = vector.load %arg4[%c0_5, %c0_6] : memref<32x32xbf16, #tpu.memory_space<vmem>>, vector<32x32xbf16>
    %cst = arith.constant dense<0.000000e+00> : vector<32x128xf32>
    %7 = tpu.matmul %6, %2, %cst {dimension_numbers = #tpu.dot_dimension_numbers<[1], [0], [0], [1], [0, 0, 1, 1], [], []>} : vector<32x32xbf16>, vector<32x128xbf16>, vector<32x128xf32> -> vector<32x128xf32>
    %c0_7 = arith.constant 0 : index
    %c0_8 = arith.constant 0 : index
    %8 = vector.load %arg5[%c0_7, %c0_8] : memref<32x16xbf16, #tpu.memory_space<vmem>>, vector<32x16xbf16>
    %cst_9 = arith.constant dense<0.000000e+00> : vector<32x256xf32>
    %9 = tpu.matmul %8, %5, %cst_9 {dimension_numbers = #tpu.dot_dimension_numbers<[1], [0], [0], [1], [0, 0, 1, 1], [], []>} : vector<32x16xbf16>, vector<16x256xbf16>, vector<32x256xf32> -> vector<32x256xf32>
    %c0_10 = arith.constant 0 : index
    %c0_11 = arith.constant 0 : index
    %10 = vector.load %arg6[%c0_10, %c0_11] : memref<32x16xbf16, #tpu.memory_space<vmem>>, vector<32x16xbf16>
    %cst_12 = arith.constant dense<0.000000e+00> : vector<32x256xf32>
    %11 = tpu.matmul %10, %5, %cst_12 {dimension_numbers = #tpu.dot_dimension_numbers<[1], [0], [0], [1], [0, 0, 1, 1], [], []>} : vector<32x16xbf16>, vector<16x256xbf16>, vector<32x256xf32> -> vector<32x256xf32>
    %12 = arith.truncf %7 : vector<32x128xf32> to vector<32x128xbf16>
    %13 = vector.shape_cast %12 : vector<32x128xbf16> to vector<4x8x128xbf16>
    %14 = arith.truncf %9 : vector<32x256xf32> to vector<32x256xbf16>
    %15 = vector.shape_cast %14 : vector<32x256xbf16> to vector<4x8x256xbf16>
    %16 = arith.truncf %11 : vector<32x256xf32> to vector<32x256xbf16>
    %17 = vector.shape_cast %16 : vector<32x256xbf16> to vector<4x8x256xbf16>
    %cst_13 = arith.constant dense<0.000000e+00> : vector<4x256x128xf32>
    %18 = tpu.matmul %15, %13, %cst_13 {dimension_numbers = #tpu.dot_dimension_numbers<[1], [1], [2], [2], [0, 0, 0, 2, 1, 2], [0], [0]>} : vector<4x8x256xbf16>, vector<4x8x128xbf16>, vector<4x256x128xf32> -> vector<4x256x128xf32>
    %cst_14 = arith.constant dense<0xFF800000> : vector<4x128xf32>
    %19 = vector.multi_reduction <maximumf>, %18, %cst_14 [1] : vector<4x256x128xf32> to vector<4x128xf32>
    %20 = vector.shape_cast %19 : vector<4x128xf32> to vector<4x1x128xf32>
    %21 = vector.broadcast %20 : vector<4x1x128xf32> to vector<4x256x128xf32>
    %22 = arith.subf %18, %21 : vector<4x256x128xf32>
    %23 = math.exp %22 : vector<4x256x128xf32>
    %cst_15 = arith.constant dense<0.000000e+00> : vector<4x128xf32>
    %24 = vector.multi_reduction <add>, %23, %cst_15 [1] : vector<4x256x128xf32> to vector<4x128xf32>
    %25 = vector.shape_cast %24 : vector<4x128xf32> to vector<4x1x128xf32>
    %26 = tpu.reciprocal %25 {approx = true} : vector<4x1x128xf32> -> vector<4x1x128xf32>
    %27 = vector.broadcast %26 : vector<4x1x128xf32> to vector<4x256x128xf32>
    %28 = arith.mulf %23, %27 : vector<4x256x128xf32>
    %29 = arith.truncf %28 : vector<4x256x128xf32> to vector<4x256x128xbf16>
    %cst_16 = arith.constant dense<0.000000e+00> : vector<4x8x128xf32>
    %30 = tpu.matmul %17, %29, %cst_16 {dimension_numbers = #tpu.dot_dimension_numbers<[2], [1], [1], [2], [0, 0, 0, 1, 1, 2], [0], [0]>} : vector<4x8x256xbf16>, vector<4x256x128xbf16>, vector<4x8x128xf32> -> vector<4x8x128xf32>
    %31 = vector.shape_cast %30 : vector<4x8x128xf32> to vector<32x128xf32>
    %32 = arith.truncf %31 : vector<32x128xf32> to vector<32x128xbf16>
    %c0_17 = arith.constant 0 : index
    %c0_18 = arith.constant 0 : index
    %33 = vector.load %arg7[%c0_17, %c0_18] : memref<32x32xbf16, #tpu.memory_space<vmem>>, vector<32x32xbf16>
    %cst_19 = arith.constant dense<0.000000e+00> : vector<32x128xf32>
    %34 = tpu.matmul %33, %32, %cst_19 {dimension_numbers = #tpu.dot_dimension_numbers<[1], [0], [0], [1], [0, 0, 1, 1], [], []>} : vector<32x32xbf16>, vector<32x128xbf16>, vector<32x128xf32> -> vector<32x128xf32>
    %c0_20 = arith.constant 0 : index
    %c0_21 = arith.constant 0 : index
    %35 = vector.load %arg8[%c0_20, %c0_21] : memref<32x1xf32, #tpu.memory_space<vmem>>, vector<32x1xf32>
    %36 = vector.broadcast %35 : vector<32x1xf32> to vector<32x128xf32>
    %37 = arith.addf %34, %36 : vector<32x128xf32>
    %c0_22 = arith.constant 0 : index
    %c0_23 = arith.constant 0 : index
    %c0_24 = arith.constant 0 : index
    %38 = vector.load %arg9[%c0_22, %c0_23, %c0_24] : memref<1x32x128xf32, #tpu.memory_space<vmem>>, vector<1x32x128xf32>
    %39 = vector.shape_cast %38 : vector<1x32x128xf32> to vector<32x128xf32>
    %40 = vector.shape_cast %37 : vector<32x128xf32> to vector<1x32x128xf32>
    tpu.vector_store %arg9[%c0_22, %c0_23, %c0_24], %40 {strides = array<i32>} : memref<1x32x128xf32, #tpu.memory_space<vmem>>, vector<1x32x128xf32>,
    return
  }
  func.func @transform_0(%arg0: i32, %arg1: i32) -> (i32, i32, i32) {
    %c0_i32 = arith.constant 0 : i32
    %c0_i32_0 = arith.constant 0 : i32
    return %arg0, %c0_i32, %arg1 : i32, i32, i32
  }
  func.func @transform_1(%arg0: i32, %arg1: i32) -> (i32, i32, i32) {
    %c0_i32 = arith.constant 0 : i32
    %c0_i32_0 = arith.constant 0 : i32
    %c0_i32_1 = arith.constant 0 : i32
    return %arg0, %c0_i32, %c0_i32_0 : i32, i32, i32
  }
  func.func @transform_2(%arg0: i32, %arg1: i32) -> (i32, i32) {
    %c0_i32 = arith.constant 0 : i32
    %c0_i32_0 = arith.constant 0 : i32
    %c0_i32_1 = arith.constant 0 : i32
    return %c0_i32, %c0_i32_0 : i32, i32
  }
  func.func @transform_3(%arg0: i32, %arg1: i32) -> (i32, i32) {
    %c0_i32 = arith.constant 0 : i32
    %c0_i32_0 = arith.constant 0 : i32
    %c0_i32_1 = arith.constant 0 : i32
    return %c0_i32, %c0_i32_0 : i32, i32
  }
  func.func @transform_4(%arg0: i32, %arg1: i32) -> (i32, i32) {
    %c0_i32 = arith.constant 0 : i32
    %c0_i32_0 = arith.constant 0 : i32
    %c0_i32_1 = arith.constant 0 : i32
    return %c0_i32, %c0_i32_0 : i32, i32
  }
  func.func @transform_5(%arg0: i32, %arg1: i32) -> (i32, i32) {
    %c0_i32 = arith.constant 0 : i32
    %c0_i32_0 = arith.constant 0 : i32
    %c0_i32_1 = arith.constant 0 : i32
    return %c0_i32, %c0_i32_0 : i32, i32
  }
  func.func @transform_6(%arg0: i32, %arg1: i32) -> (i32, i32) {
    %c0_i32 = arith.constant 0 : i32
    %c0_i32_0 = arith.constant 0 : i32
    %c0_i32_1 = arith.constant 0 : i32
    return %c0_i32, %c0_i32_0 : i32, i32
  }
  func.func @transform_7(%arg0: i32, %arg1: i32) -> (i32, i32, i32) {
    %c0_i32 = arith.constant 0 : i32
    %c0_i32_0 = arith.constant 0 : i32
    return %arg0, %c0_i32, %arg1 : i32, i32, i32
  }
}

</mosaic_0001>

<llo_original>
// kernel: tpu_custom_call.1
$region0: #{tpu_custom_call.1}
  #allocation0 [shape = 'u32[]', space=smem, size = 0x4, offset = 0x4, fixed_abs, tag = 'smem constant byte address 0x4 - core index']
  #allocation1 [shape = 'u32[144,128]{1,0:T(1,128)}', space=vmem, size = 0x12000, scoped, tag = 'internal scratch']
  %s0 = inlined_call_operand.hbm [shape: f32[2,32,256], index: 0, kind: input, shape index: {}]
  %s1 = inlined_call_operand.vmem [shape: f32[2,16,256], index: 1, kind: input, shape index: {}]
  %s2 = inlined_call_operand.vmem [shape: bf16[32,32], index: 2, kind: input, shape index: {}]
  %s3 = inlined_call_operand.vmem [shape: bf16[32,16], index: 3, kind: input, shape index: {}]
  %s4 = inlined_call_operand.vmem [shape: bf16[32,16], index: 4, kind: input, shape index: {}]
  %s5 = inlined_call_operand.vmem [shape: bf16[32,32], index: 5, kind: input, shape index: {}]
  %s6 = inlined_call_operand.vmem [shape: f32[32,1], index: 6, kind: input, shape index: {}]
  %s7 = inlined_call_operand.hbm [shape: f32[2,32,256], index: 7, kind: output, shape index: {}]
  %s8 = sld [smem:[#allocation0]]
  $region65: #{tpu_custom_call.1} parent=0
    _
  %s10 = ssub.s32 1, %s8
  %s11 = scalar_select 0, %s10, %s8
  $region1: #{tpu_custom_call.1} parent=0
    #allocation2 [shape = 'u8[32768]{0}', space=vmem, size = 0x8000, scoped, tag = 'input window, operand 0']
    #allocation3 [shape = 's32[2]{0}', space=sflag, size = 0x8, scoped, tag = 'scoped memory for tpu_custom_call.1']
    #allocation4 [shape = 's32[2]{0}', space=sflag, size = 0x8, scoped, tag = 'scoped memory for tpu_custom_call.1']
    #allocation5 [shape = 'u8[32768]{0}', space=vmem, size = 0x8000, scoped, tag = 'output window, operand 0']
    %12 = vsyncpa [#allocation3], 0
    %s13 = scalar_lea.sflag [#allocation3], 1
    %14 = vsyncpa %s13, 0
    %15 = vsyncpa [#allocation4], 0
    %s16 = scalar_lea.sflag [#allocation4], 1
    %17 = vsyncpa %s16, 0
    loop: start=0, step=1, limit=6
    $region2: #{tpu_custom_call.1} parent=1 // loop_pre_header
      _
    $region3: #{tpu_custom_call.1} parent=1 // loop_header
      %s19 = sphi 0, %s23
      %p20 = scmp.ge.s32.totalorder %s19, 6
      %s26 = sphi 0, %s38
      %s27 = sphi 0, %s34
      %s28 = sphi 0, %s26
      %s29 = sphi 0, %s27
      %s30 = sphi 0, %s28
      %s31 = sphi 0, %s29
      %s43 = sphi 0, %s45
      %s46 = sphi 0, %s43
      %s47 = sphi 0, %s46
      %s63 = sphi 0, %s47
      %s69 = sphi 0, %s71
      %s72 = sphi 0, %s69
      %s73 = sphi 0, %s72
      %s89 = sphi 0, %s73
      %s93 = sphi 0, %s93
      %s95 = sphi 0, %s93
      %s96 = sphi 0, %s95
      %s110 = sphi 0, %s96
      %s114 = sphi 0, %s114
      %s116 = sphi 0, %s114
      %s117 = sphi 0, %s116
      %s131 = sphi 0, %s117
      %s135 = sphi 0, %s135
      %s137 = sphi 0, %s135
      %s138 = sphi 0, %s137
      %s152 = sphi 0, %s138
      %s156 = sphi 0, %s156
      %s158 = sphi 0, %s156
      %s159 = sphi 0, %s158
      %s173 = sphi 0, %s159
      %s177 = sphi 0, %s177
      %s179 = sphi 0, %s177
      %s180 = sphi 0, %s179
      %s194 = sphi 0, %s180
      %s202 = sphi 0, %s204
      %s205 = sphi 0, %s202
      %s206 = sphi 0, %s205
      %s222 = sphi 0, %s206
    $region4: #{tpu_custom_call.1} parent=1 // loop_header_branch
      %22 = sbr.rel (%p20) target = $region8
    $region5: #{tpu_custom_call.1} parent=1 // loop_body
      %s24 = ssub.s32 %s19, 1
      %s25 = ssub.s32 %s19, 2
      %s32 = sadd.s32 1, %s27
      %p33 = scmp.ge.s32.totalorder %s32, 2
      %s34 = scalar_select %p33, 0, %s32
      %s35 = sadd.s32 1, %s26
      %s36 = scalar_select %p33, %s35, %s26
      %p37 = scmp.ge.s32.totalorder %s36, 2
      %s38 = scalar_select %p37, 0, %s36
      %s39 = ssub.s32 %s26, %s38
      %s40 = ssub.s32 %s27, %s34
      %s41 = sor.u32 %s39, %s40
      %p42 = scmp.eq.s32.totalorder %s41, 0
      %s44 = sadd.s32 %s43, 1
      %s45 = scalar_select %p42, %s43, %s44
      %p48 = pneg %p42
      %p49 = scmp.eq.s32.totalorder %s19, 3
      %p50 = por %p48, %p49
      %p51 = scmp.ne.s32.totalorder %s43, %s46
      %p52 = scmp.eq.s32.totalorder %s19, 0
      %p53 = por %p51, %p52
      %p54 = scmp.ne.s32.totalorder %s43, %s46
      %p55 = scmp.eq.s32.totalorder %s24, 3
      %p56 = por %p54, %p55
      %p57 = scmp.ne.s32.totalorder %s46, %s47
      %p58 = scmp.eq.s32.totalorder %s24, 0
      %p59 = por %p57, %p58
      %p60 = scmp.ne.s32.totalorder %s46, %s47
      %p61 = scmp.eq.s32.totalorder %s25, 3
      %p62 = por %p60, %p61
      %p64 = scmp.ne.s32.totalorder %s47, %s63
      %p65 = scmp.eq.s32.totalorder %s25, 0
      %p66 = por %p64, %p65
      %s67 = ssub.s32 %s26, %s38
      %p68 = scmp.eq.s32.totalorder %s67, 0
      %s70 = sadd.s32 %s69, 1
      %s71 = scalar_select %p68, %s69, %s70
      %p74 = pneg %p68
      %p75 = scmp.eq.s32.totalorder %s19, 3
      %p76 = por %p74, %p75
      %p77 = scmp.ne.s32.totalorder %s69, %s72
      %p78 = scmp.eq.s32.totalorder %s19, 0
      %p79 = por %p77, %p78
      %p80 = scmp.ne.s32.totalorder %s69, %s72
      %p81 = scmp.eq.s32.totalorder %s24, 3
      %p82 = por %p80, %p81
      %p83 = scmp.ne.s32.totalorder %s72, %s73
      %p84 = scmp.eq.s32.totalorder %s24, 0
      %p85 = por %p83, %p84
      %p86 = scmp.ne.s32.totalorder %s72, %s73
      %p87 = scmp.eq.s32.totalorder %s25, 3
      %p88 = por %p86, %p87
      %p90 = scmp.ne.s32.totalorder %s73, %s89
      %p91 = scmp.eq.s32.totalorder %s25, 0
      %p92 = por %p90, %p91
      %s94 = sadd.s32 %s93, 1
      %p97 = scmp.eq.s32.totalorder %s19, 3
      %p98 = scmp.ne.s32.totalorder %s93, %s95
      %p99 = scmp.eq.s32.totalorder %s19, 0
      %p100 = por %p98, %p99
      %p101 = scmp.ne.s32.totalorder %s93, %s95
      %p102 = scmp.eq.s32.totalorder %s24, 3
      %p103 = por %p101, %p102
      %p104 = scmp.ne.s32.totalorder %s95, %s96
      %p105 = scmp.eq.s32.totalorder %s24, 0
      %p106 = por %p104, %p105
      %p107 = scmp.ne.s32.totalorder %s95, %s96
      %p108 = scmp.eq.s32.totalorder %s25, 3
      %p109 = por %p107, %p108
      %p111 = scmp.ne.s32.totalorder %s96, %s110
      %p112 = scmp.eq.s32.totalorder %s25, 0
      %p113 = por %p111, %p112
      %s115 = sadd.s32 %s114, 1
      %p118 = scmp.eq.s32.totalorder %s19, 3
      %p119 = scmp.ne.s32.totalorder %s114, %s116
      %p120 = scmp.eq.s32.totalorder %s19, 0
      %p121 = por %p119, %p120
      %p122 = scmp.ne.s32.totalorder %s114, %s116
      %p123 = scmp.eq.s32.totalorder %s24, 3
      %p124 = por %p122, %p123
      %p125 = scmp.ne.s32.totalorder %s116, %s117
      %p126 = scmp.eq.s32.totalorder %s24, 0
      %p127 = por %p125, %p126
      %p128 = scmp.ne.s32.totalorder %s116, %s117
      %p129 = scmp.eq.s32.totalorder %s25, 3
      %p130 = por %p128, %p129
      %p132 = scmp.ne.s32.totalorder %s117, %s131
      %p133 = scmp.eq.s32.totalorder %s25, 0
      %p134 = por %p132, %p133
      %s136 = sadd.s32 %s135, 1
      %p139 = scmp.eq.s32.totalorder %s19, 3
      %p140 = scmp.ne.s32.totalorder %s135, %s137
      %p141 = scmp.eq.s32.totalorder %s19, 0
      %p142 = por %p140, %p141
      %p143 = scmp.ne.s32.totalorder %s135, %s137
      %p144 = scmp.eq.s32.totalorder %s24, 3
      %p145 = por %p143, %p144
      %p146 = scmp.ne.s32.totalorder %s137, %s138
      %p147 = scmp.eq.s32.totalorder %s24, 0
      %p148 = por %p146, %p147
      %p149 = scmp.ne.s32.totalorder %s137, %s138
      %p150 = scmp.eq.s32.totalorder %s25, 3
      %p151 = por %p149, %p150
      %p153 = scmp.ne.s32.totalorder %s138, %s152
      %p154 = scmp.eq.s32.totalorder %s25, 0
      %p155 = por %p153, %p154
      %s157 = sadd.s32 %s156, 1
      %p160 = scmp.eq.s32.totalorder %s19, 3
      %p161 = scmp.ne.s32.totalorder %s156, %s158
      %p162 = scmp.eq.s32.totalorder %s19, 0
      %p163 = por %p161, %p162
      %p164 = scmp.ne.s32.totalorder %s156, %s158
      %p165 = scmp.eq.s32.totalorder %s24, 3
      %p166 = por %p164, %p165
      %p167 = scmp.ne.s32.totalorder %s158, %s159
      %p168 = scmp.eq.s32.totalorder %s24, 0
      %p169 = por %p167, %p168
      %p170 = scmp.ne.s32.totalorder %s158, %s159
      %p171 = scmp.eq.s32.totalorder %s25, 3
      %p172 = por %p170, %p171
      %p174 = scmp.ne.s32.totalorder %s159, %s173
      %p175 = scmp.eq.s32.totalorder %s25, 0
      %p176 = por %p174, %p175
      %s178 = sadd.s32 %s177, 1
      %p181 = scmp.eq.s32.totalorder %s19, 3
      %p182 = scmp.ne.s32.totalorder %s177, %s179
      %p183 = scmp.eq.s32.totalorder %s19, 0
      %p184 = por %p182, %p183
      %p185 = scmp.ne.s32.totalorder %s177, %s179
      %p186 = scmp.eq.s32.totalorder %s24, 3
      %p187 = por %p185, %p186
      %p188 = scmp.ne.s32.totalorder %s179, %s180
      %p189 = scmp.eq.s32.totalorder %s24, 0
      %p190 = por %p188, %p189
      %p191 = scmp.ne.s32.totalorder %s179, %s180
      %p192 = scmp.eq.s32.totalorder %s25, 3
      %p193 = por %p191, %p192
      %p195 = scmp.ne.s32.totalorder %s180, %s194
      %p196 = scmp.eq.s32.totalorder %s25, 0
      %p197 = por %p195, %p196
      %s198 = ssub.s32 %s26, %s38
      %s199 = ssub.s32 %s27, %s34
      %s200 = sor.u32 %s198, %s199
      %p201 = scmp.eq.s32.totalorder %s200, 0
      %s203 = sadd.s32 %s202, 1
      %s204 = scalar_select %p201, %s202, %s203
      %p207 = pneg %p201
      %p208 = scmp.eq.s32.totalorder %s19, 3
      %p209 = por %p207, %p208
      %p210 = scmp.ne.s32.totalorder %s202, %s205
      %p211 = scmp.eq.s32.totalorder %s19, 0
      %p212 = por %p210, %p211
      %p213 = scmp.ne.s32.totalorder %s202, %s205
      %p214 = scmp.eq.s32.totalorder %s24, 3
      %p215 = por %p213, %p214
      %p216 = scmp.ne.s32.totalorder %s205, %s206
      %p217 = scmp.eq.s32.totalorder %s24, 0
      %p218 = por %p216, %p217
      %p219 = scmp.ne.s32.totalorder %s205, %s206
      %p220 = scmp.eq.s32.totalorder %s25, 3
      %p221 = por %p219, %p220
      %p223 = scmp.ne.s32.totalorder %s206, %s222
      %p224 = scmp.eq.s32.totalorder %s25, 0
      %p225 = por %p223, %p224
      %p226 = scmp.le.s32.totalorder 1, %s19
      %p227 = scmp.lt.s32.totalorder %s19, 5
      %p228 = pnand %p226, %p227
      %p229 = pneg %p228
      // Predicated region
      $region9: #{tpu_custom_call.1} parent=5 // pred_check
        _
      $region10: #{tpu_custom_call.1} parent=5 // pred_check_branch
        %231 = sbr.rel (%p228) target = $region12
      $region11: #{tpu_custom_call.1} parent=5 // pred_region
        %s232 = ssub.s32 %s19, 1
        // Predicated region
        $region13: #{tpu_custom_call.1} parent=11 // pred_check
          %p233 = pneg %p106
        $region14: #{tpu_custom_call.1} parent=11 // pred_check_branch
          %235 = sbr.rel (%p233) target = $region16
        $region15: #{tpu_custom_call.1} parent=11 // pred_region
          _
        $region16: #{tpu_custom_call.1} parent=11 // pred_fallthru
          _
        // Predicated region
        $region17: #{tpu_custom_call.1} parent=11 // pred_check
          %p236 = pneg %p127
        $region18: #{tpu_custom_call.1} parent=11 // pred_check_branch
          %238 = sbr.rel (%p236) target = $region20
        $region19: #{tpu_custom_call.1} parent=11 // pred_region
          _
        $region20: #{tpu_custom_call.1} parent=11 // pred_fallthru
          _
        // Predicated region
        $region21: #{tpu_custom_call.1} parent=11 // pred_check
          %p239 = pneg %p148
        $region22: #{tpu_custom_call.1} parent=11 // pred_check_branch
          %241 = sbr.rel (%p239) target = $region24
        $region23: #{tpu_custom_call.1} parent=11 // pred_region
          _
        $region24: #{tpu_custom_call.1} parent=11 // pred_fallthru
          _
        // Predicated region
        $region25: #{tpu_custom_call.1} parent=11 // pred_check
          %p242 = pneg %p169
        $region26: #{tpu_custom_call.1} parent=11 // pred_check_branch
          %244 = sbr.rel (%p242) target = $region28
        $region27: #{tpu_custom_call.1} parent=11 // pred_region
          _
        $region28: #{tpu_custom_call.1} parent=11 // pred_fallthru
          _
        // Predicated region
        $region29: #{tpu_custom_call.1} parent=11 // pred_check
          %p245 = pneg %p190
        $region30: #{tpu_custom_call.1} parent=11 // pred_check_branch
          %247 = sbr.rel (%p245) target = $region32
        $region31: #{tpu_custom_call.1} parent=11 // pred_region
          _
        $region32: #{tpu_custom_call.1} parent=11 // pred_fallthru
          _
      $region12: #{tpu_custom_call.1} parent=5 // pred_fallthru
        _
      %p248 = scmp.lt.s32.totalorder %s19, 4
      // Predicated region
      $region33: #{tpu_custom_call.1} parent=5 // pred_check
        %p249 = pneg %p248
      $region34: #{tpu_custom_call.1} parent=5 // pred_check_branch
        %251 = sbr.rel (%p249) target = $region36
      $region35: #{tpu_custom_call.1} parent=5 // pred_region
        // Predicated region
        $region37: #{tpu_custom_call.1} parent=35 // pred_check
          %p252 = pneg %p53
        $region38: #{tpu_custom_call.1} parent=35 // pred_check_branch
          %254 = sbr.rel (%p252) target = $region40
        $region39: #{tpu_custom_call.1} parent=35 // pred_region
          %s255 = sand.u32 %s43, 1
          %s256 = scalar_lea.sflag [#allocation3], %s255
          %s257 = sand.u32 %s43, 1
          %s258 = smul.addr %s257, 32
          %s259 = scalar_lea.vmem [#allocation2], %s258
          %s261 = ssub.s32 512, 512
          %262 = vsyncadd %s256, %s261
          %s263 = smul.addr %s26, 8
          %s264 = sadd.s32 %s27, %s263
          %s265 = smul.addr %s264, 128
          %s266 = scalar_lea.hbm %s0, %s265
          %s267 = sshll.u32 %s259, 4
          %s268 = int_to_ptr.vmem [resolvable:$true] %s267
          %273 = dma.hbm_to_vmem [thread:$0]  %s266, 512, %s268, %s256, 256, 128, 8
        $region40: #{tpu_custom_call.1} parent=35 // pred_fallthru
          _
        // Predicated region
        $region41: #{tpu_custom_call.1} parent=35 // pred_check
          %p274 = pneg %p79
        $region42: #{tpu_custom_call.1} parent=35 // pred_check_branch
          %276 = sbr.rel (%p274) target = $region44
        $region43: #{tpu_custom_call.1} parent=35 // pred_region
          %p277 = scmp.lt.s32.totalorder %s26, 1
          %s278 = scalar_select %p277, %s26, 1
          %s279 = smul.addr %s278, 4
          %s280 = smul.addr %s279, 8
          %s281 = scalar_lea.vmem %s1, %s280
        $region44: #{tpu_custom_call.1} parent=35 // pred_fallthru
          _
      $region36: #{tpu_custom_call.1} parent=5 // pred_fallthru
        _
      %p282 = scmp.le.s32.totalorder 1, %s19
      %p283 = scmp.lt.s32.totalorder %s19, 5
      %p284 = pnand %p282, %p283
      %p285 = pneg %p284
      // Predicated region
      $region45: #{tpu_custom_call.1} parent=5 // pred_check
        _
      $region46: #{tpu_custom_call.1} parent=5 // pred_check_branch
        %287 = sbr.rel (%p284) target = $region48
      $region47: #{tpu_custom_call.1} parent=5 // pred_region
        %s288 = ssub.s32 %s19, 1
        %s289 = sand.u32 %s46, 1
        %s290 = scalar_lea.sflag [#allocation3], %s289
        %s291 = sand.u32 %s46, 1
        %s292 = smul.addr %s291, 32
        %s293 = scalar_lea.vmem [#allocation2], %s292
        // Predicated region
        $region49: #{tpu_custom_call.1} parent=47 // pred_check
          %p294 = pneg %p59
        $region50: #{tpu_custom_call.1} parent=47 // pred_check_branch
          %296 = sbr.rel (%p294) target = $region52
        $region51: #{tpu_custom_call.1} parent=47 // pred_region
          %297 = dma.done %s290, 512
        $region52: #{tpu_custom_call.1} parent=47 // pred_fallthru
          _
        %s298 = sand.u32 %s46, 1
        %s299 = scalar_lea.sflag [#allocation3], %s298
        %s300 = sand.u32 %s46, 1
        %s301 = smul.addr %s300, 32
        %s302 = scalar_lea.vmem [#allocation2], %s301
        %p303 = pneg %p59
        %p304 = pneg %p56
        %p305 = scmp.lt.s32.totalorder %s28, 1
        %s306 = scalar_select %p305, %s28, 1
        %s307 = smul.addr %s306, 4
        %s308 = smul.addr %s307, 8
        %s309 = scalar_lea.vmem %s1, %s308
        %p310 = pneg %p85
        %p311 = pneg %p82
        %p312 = pneg %p106
        %p313 = pneg %p103
        %p314 = pneg %p127
        %p315 = pneg %p124
        %p316 = pneg %p148
        %p317 = pneg %p145
        %p318 = pneg %p169
        %p319 = pneg %p166
        %p320 = pneg %p190
        %p321 = pneg %p187
        %p322 = pneg %p218
        %p323 = pneg %p215
        %s324 = sand.u32 %s205, 1
        %s325 = scalar_lea.sflag [#allocation4], %s324
        %s326 = sand.u32 %s205, 1
        %s327 = smul.addr %s326, 32
        %s328 = scalar_lea.vmem [#allocation5], %s327
        %p329 = scmp.lt.s32.totalorder %s28, 1
        %s330 = scalar_select %p329, %s28, 1
        %s331 = smul.addr %s330, 4
        %s332 = smul.addr %s331, 8
        %s333 = scalar_lea.vmem %s1, %s332
        %v335 = vld [vmem:[%s293] sm:$0xff]
        %v336 = vld [vmem:[%s293 + $0x8] sm:$0xff]
        %v337 = vld [vmem:[%s293 + $0x10] sm:$0xff]
        %v338 = vld [vmem:[%s293 + $0x18] sm:$0xff]
        %v339 = vpack.c.bf16 %v336, %v335
        %v340 = vpack.c.bf16 %v338, %v337
        %v341 = vld [vmem:[%s333] sm:$0xff]
        %v342 = vld [vmem:[%s333 + $0x8] sm:$0xff]
        %v343 = vld [vmem:[%s333 + $0x10] sm:$0xff]
        %v344 = vld [vmem:[%s333 + $0x18] sm:$0xff]
        %v345 = vpack.c.bf16 %v343, %v341
        %v346 = vpack.c.bf16 %v344, %v342
        %v347 = vld [vmem:[%s2] sm:$0xf]
        %v348 = vld [vmem:[%s2 + $0x4] sm:$0xf]
        %v349 = vld [vmem:[%s2 + $0x8] sm:$0xf]
        %v350 = vld [vmem:[%s2 + $0xc] sm:$0xf]
        %v355 = vunpack.c.l.b16 %v347
        %v356 = vunpack.c.l.b16 %v348
        %v357 = vunpack.c.l.b16 %v349
        %v358 = vunpack.c.l.b16 %v350
        %v359 = vpack.c.b16 %v356, %v355
        %v360 = vpack.c.b16 %v358, %v357
        %vm361 = vcmask 261120
        %v363 = vsel %vm361, %v359, 0
        %v366 = vsel %vm361, %v360, 0
        %368 = vmatprep.subr.bf16.mxu0 0
        %369 = vmatpush1.bf16.msra.mxu0 %v339
        %370 = vmatprep.subr.bf16.mxu0 0
        %371 = vmatpush1.bf16.msra.mxu0 %v340
        %372 = vmatprep.subr.bf16.mxu0 0
        %373 = vmatpush1.bf16.msra.mxu0 0
        %374 = vmatprep.subr.bf16.mxu0 0
        %375 = vmatpush1.bf16.msra.mxu0 0
        %376 = vmatprep.subr.bf16.mxu0 0
        %377 = vmatpush1.bf16.msra.mxu0 0
        %378 = vmatprep.subr.bf16.mxu0 0
        %379 = vmatpush1.bf16.msra.mxu0 0
        %380 = vmatprep.subr.bf16.mxu0 0
        %381 = vmatpush1.bf16.msra.mxu0 0
        %382 = vmatprep.subr.bf16.mxu0 0
        %383 = vmatpush1.bf16.msra.mxu0 0
        %384 = vmatprep.subr.bf16.mxu0 0
        %385 = vmatpush1.bf16.msra.mxu0 0
        %386 = vmatprep.subr.bf16.mxu0 0
        %387 = vmatpush1.bf16.msra.mxu0 0
        %388 = vmatprep.subr.bf16.mxu0 0
        %389 = vmatpush1.bf16.msra.mxu0 0
        %390 = vmatprep.subr.bf16.mxu0 0
        %391 = vmatpush1.bf16.msra.mxu0 0
        %392 = vmatprep.subr.bf16.mxu0 0
        %393 = vmatpush1.bf16.msra.mxu0 0
        %394 = vmatprep.subr.bf16.mxu0 0
        %395 = vmatpush1.bf16.msra.mxu0 0
        %396 = vmatprep.subr.bf16.mxu0 0
        %397 = vmatpush1.bf16.msra.mxu0 0
        %398 = vmatprep.subr.bf16.mxu0 0
        %399 = vmatpush1.bf16.msra.mxu0 0
        %400 = vmatprep.mubr.bf16.mxu0 0
        %401 = vmatmul.mubr.bf16.gmra.mrb[0].mxu0 %v363
        %v402 = vpop.f32.mrb[0].mxu0
        %v403 = vadd.f32 0.0, %v402
        %v404 = vpop.f32.mrb[0].mxu0
        %v405 = vpop.f32.mrb[0].mxu0
        %v406 = vadd.f32 0.0, %v405
        %v407 = vpop.f32.mrb[0].mxu0
        %408 = vmatprep.mubr.bf16.mxu0 0
        %409 = vmatmul.mubr.bf16.gmra.mrb[0].mxu0 %v366
        %v410 = vpop.f32.mrb[0].mxu0
        %v411 = vadd.f32 0.0, %v410
        %v412 = vpop.f32.mrb[0].mxu0
        %v413 = vpop.f32.mrb[0].mxu0
        %v414 = vadd.f32 0.0, %v413
        %v415 = vpop.f32.mrb[0].mxu0
        %416 = vdwg.mxu0
        %v417 = vld [vmem:[%s3] sm:$0xf]
        %v418 = vld [vmem:[%s3 + $0x4] sm:$0xf]
        %v419 = vld [vmem:[%s3 + $0x8] sm:$0xf]
        %v420 = vld [vmem:[%s3 + $0xc] sm:$0xf]
        %v425 = vunpack.c.l.b16 %v417
        %v426 = vunpack.c.l.b16 %v418
        %v427 = vunpack.c.l.b16 %v419
        %v428 = vunpack.c.l.b16 %v420
        %v429 = vpack.c.b16 %v426, %v425
        %v430 = vpack.c.b16 %v428, %v427
        %vm431 = vcmask 130048
        %v433 = vsel %vm431, %v429, 0
        %v436 = vsel %vm431, %v430, 0
        %438 = vmatprep.subr.bf16.mxu0 %v346
        %439 = vmatpush1.bf16.msra.mxu0 %v345
        %440 = vmatprep.subr.bf16.mxu0 0
        %441 = vmatpush1.bf16.msra.mxu0 0
        %442 = vmatprep.subr.bf16.mxu0 0
        %443 = vmatpush1.bf16.msra.mxu0 0
        %444 = vmatprep.subr.bf16.mxu0 0
        %445 = vmatpush1.bf16.msra.mxu0 0
        %446 = vmatprep.subr.bf16.mxu0 0
        %447 = vmatpush1.bf16.msra.mxu0 0
        %448 = vmatprep.subr.bf16.mxu0 0
        %449 = vmatpush1.bf16.msra.mxu0 0
        %450 = vmatprep.subr.bf16.mxu0 0
        %451 = vmatpush1.bf16.msra.mxu0 0
        %452 = vmatprep.subr.bf16.mxu0 0
        %453 = vmatpush1.bf16.msra.mxu0 0
        %454 = vmatprep.subr.bf16.mxu0 0
        %455 = vmatpush1.bf16.msra.mxu0 0
        %456 = vmatprep.subr.bf16.mxu0 0
        %457 = vmatpush1.bf16.msra.mxu0 0
        %458 = vmatprep.subr.bf16.mxu0 0
        %459 = vmatpush1.bf16.msra.mxu0 0
        %460 = vmatprep.subr.bf16.mxu0 0
        %461 = vmatpush1.bf16.msra.mxu0 0
        %462 = vmatprep.subr.bf16.mxu0 0
        %463 = vmatpush1.bf16.msra.mxu0 0
        %464 = vmatprep.subr.bf16.mxu0 0
        %465 = vmatpush1.bf16.msra.mxu0 0
        %466 = vmatprep.subr.bf16.mxu0 0
        %467 = vmatpush1.bf16.msra.mxu0 0
        %468 = vmatprep.subr.bf16.mxu0 0
        %469 = vmatpush1.bf16.msra.mxu0 0
        %470 = vmatprep.mubr.bf16.mxu0 0
        %471 = vmatmul.mubr.bf16.gmra.mrb[0].mxu0 %v433
        %v472 = vpop.f32.mrb[0].mxu0
        %v473 = vadd.f32 0.0, %v472
        %v474 = vpop.f32.mrb[0].mxu0
        %v475 = vadd.f32 0.0, %v474
        %v476 = vpop.f32.mrb[0].mxu0
        %v477 = vadd.f32 0.0, %v476
        %v478 = vpop.f32.mrb[0].mxu0
        %v479 = vadd.f32 0.0, %v478
        %480 = vmatprep.mubr.bf16.mxu0 0
        %481 = vmatmul.mubr.bf16.gmra.mrb[0].mxu0 %v436
        %v482 = vpop.f32.mrb[0].mxu0
        %v483 = vadd.f32 0.0, %v482
        %v484 = vpop.f32.mrb[0].mxu0
        %v485 = vadd.f32 0.0, %v484
        %v486 = vpop.f32.mrb[0].mxu0
        %v487 = vadd.f32 0.0, %v486
        %v488 = vpop.f32.mrb[0].mxu0
        %v489 = vadd.f32 0.0, %v488
        %490 = vdwg.mxu0
        %v491 = vld [vmem:[%s4] sm:$0xf]
        %v492 = vld [vmem:[%s4 + $0x4] sm:$0xf]
        %v493 = vld [vmem:[%s4 + $0x8] sm:$0xf]
        %v494 = vld [vmem:[%s4 + $0xc] sm:$0xf]
        %v499 = vunpack.c.l.b16 %v491
        %v500 = vunpack.c.l.b16 %v492
        %v501 = vunpack.c.l.b16 %v493
        %v502 = vunpack.c.l.b16 %v494
        %v503 = vpack.c.b16 %v500, %v499
        %v504 = vpack.c.b16 %v502, %v501
        %v506 = vsel %vm431, %v503, 0
        %v509 = vsel %vm431, %v504, 0
        %511 = vmatprep.subr.bf16.mxu0 %v346
        %512 = vmatpush1.bf16.msra.mxu0 %v345
        %513 = vmatprep.subr.bf16.mxu0 0
        %514 = vmatpush1.bf16.msra.mxu0 0
        %515 = vmatprep.subr.bf16.mxu0 0
        %516 = vmatpush1.bf16.msra.mxu0 0
        %517 = vmatprep.subr.bf16.mxu0 0
        %518 = vmatpush1.bf16.msra.mxu0 0
        %519 = vmatprep.subr.bf16.mxu0 0
        %520 = vmatpush1.bf16.msra.mxu0 0
        %521 = vmatprep.subr.bf16.mxu0 0
        %522 = vmatpush1.bf16.msra.mxu0 0
        %523 = vmatprep.subr.bf16.mxu0 0
        %524 = vmatpush1.bf16.msra.mxu0 0
        %525 = vmatprep.subr.bf16.mxu0 0
        %526 = vmatpush1.bf16.msra.mxu0 0
        %527 = vmatprep.subr.bf16.mxu0 0
        %528 = vmatpush1.bf16.msra.mxu0 0
        %529 = vmatprep.subr.bf16.mxu0 0
        %530 = vmatpush1.bf16.msra.mxu0 0
        %531 = vmatprep.subr.bf16.mxu0 0
        %532 = vmatpush1.bf16.msra.mxu0 0
        %533 = vmatprep.subr.bf16.mxu0 0
        %534 = vmatpush1.bf16.msra.mxu0 0
        %535 = vmatprep.subr.bf16.mxu0 0
        %536 = vmatpush1.bf16.msra.mxu0 0
        %537 = vmatprep.subr.bf16.mxu0 0
        %538 = vmatpush1.bf16.msra.mxu0 0
        %539 = vmatprep.subr.bf16.mxu0 0
        %540 = vmatpush1.bf16.msra.mxu0 0
        %541 = vmatprep.subr.bf16.mxu0 0
        %542 = vmatpush1.bf16.msra.mxu0 0
        %543 = vmatprep.mubr.bf16.mxu0 0
        %544 = vmatmul.mubr.bf16.gmra.mrb[0].mxu0 %v506
        %v545 = vpop.f32.mrb[0].mxu0
        %v546 = vadd.f32 0.0, %v545
        %v547 = vpop.f32.mrb[0].mxu0
        %v548 = vadd.f32 0.0, %v547
        %v549 = vpop.f32.mrb[0].mxu0
        %v550 = vadd.f32 0.0, %v549
        %v551 = vpop.f32.mrb[0].mxu0
        %v552 = vadd.f32 0.0, %v551
        %553 = vmatprep.mubr.bf16.mxu0 0
        %554 = vmatmul.mubr.bf16.gmra.mrb[0].mxu0 %v509
        %v555 = vpop.f32.mrb[0].mxu0
        %v556 = vadd.f32 0.0, %v555
        %v557 = vpop.f32.mrb[0].mxu0
        %v558 = vadd.f32 0.0, %v557
        %v559 = vpop.f32.mrb[0].mxu0
        %v560 = vadd.f32 0.0, %v559
        %v561 = vpop.f32.mrb[0].mxu0
        %v562 = vadd.f32 0.0, %v561
        %563 = vdwg.mxu0
        %v564 = vpack.c.bf16 %v406, %v403
        %v565 = vpack.c.bf16 %v414, %v411
        %v568 = vunpack.c.l.b16 %v564
        %v569 = vunpack.c.h.b16 %v564
        %v570 = vunpack.c.l.b16 %v565
        %v571 = vunpack.c.h.b16 %v565
        %v572 = vpack.c.b16 %v568, %v568
        %v573 = vpack.c.b16 %v569, %v569
        %v574 = vpack.c.b16 %v570, %v570
        %v575 = vpack.c.b16 %v571, %v571
        %v576 = vpack.c.bf16 %v477, %v473
        %v577 = vpack.c.bf16 %v479, %v475
        %v578 = vpack.c.bf16 %v487, %v483
        %v579 = vpack.c.bf16 %v489, %v485
        %v584 = vunpack.c.l.b16 %v576
        %v585 = vunpack.c.l.b16 %v577
        %v586 = vunpack.c.h.b16 %v576
        %v587 = vunpack.c.h.b16 %v577
        %v588 = vunpack.c.l.b16 %v578
        %v589 = vunpack.c.l.b16 %v579
        %v590 = vunpack.c.h.b16 %v578
        %v591 = vunpack.c.h.b16 %v579
        %v592 = vpack.c.bf16 %v550, %v546
        %v593 = vpack.c.bf16 %v552, %v548
        %v594 = vpack.c.bf16 %v560, %v556
        %v595 = vpack.c.bf16 %v562, %v558
        %v600 = vunpack.c.l.b16 %v592
        %v601 = vunpack.c.l.b16 %v593
        %v602 = vunpack.c.h.b16 %v592
        %v603 = vunpack.c.h.b16 %v593
        %v604 = vunpack.c.l.b16 %v594
        %v605 = vunpack.c.l.b16 %v595
        %v606 = vunpack.c.h.b16 %v594
        %v607 = vunpack.c.h.b16 %v595
        %v608 = vpack.c.b16 %v584, %v584
        %v609 = vpack.c.b16 %v585, %v585
        %612 = vxpose.xlu0.c.b16.start [1/8] %v608, 128
        %613 = vxpose.xlu0.c.b16.cont [2/8] 0, 128
        %614 = vxpose.xlu0.c.b16.cont [3/8] 0, 128
        %615 = vxpose.xlu0.c.b16.cont [4/8] 0, 128
        %616 = vxpose.xlu0.c.b16.cont [5/8] 0, 128
        %617 = vxpose.xlu0.c.b16.cont [6/8] 0, 128
        %618 = vxpose.xlu0.c.b16.cont [7/8] 0, 128
        %619 = vxpose.xlu0.c.b16.end [8/8] 0, 128
        %v620 = vpop.trf.xlu0
        %v621 = vpop.trf.xlu0
        %v622 = vpop.trf.xlu0
        %v623 = vpop.trf.xlu0
        %v624 = vpop.trf.xlu0
        %v625 = vpop.trf.xlu0
        %v626 = vpop.trf.xlu0
        %v627 = vpop.trf.xlu0
        %628 = vxpose.xlu0.c.b16.start [1/8] %v609, 128
        %629 = vxpose.xlu0.c.b16.cont [2/8] 0, 128
        %630 = vxpose.xlu0.c.b16.cont [3/8] 0, 128
        %631 = vxpose.xlu0.c.b16.cont [4/8] 0, 128
        %632 = vxpose.xlu0.c.b16.cont [5/8] 0, 128
        %633 = vxpose.xlu0.c.b16.cont [6/8] 0, 128
        %634 = vxpose.xlu0.c.b16.cont [7/8] 0, 128
        %635 = vxpose.xlu0.c.b16.end [8/8] 0, 128
        %v636 = vpop.trf.xlu0
        %v637 = vpop.trf.xlu0
        %v638 = vpop.trf.xlu0
        %v639 = vpop.trf.xlu0
        %v640 = vpop.trf.xlu0
        %v641 = vpop.trf.xlu0
        %v642 = vpop.trf.xlu0
        %v643 = vpop.trf.xlu0
        %vm644 = vcmask 64512
        %v646 = vsel %vm644, %v620, 0
        %v649 = vsel %vm644, %v621, 0
        %v652 = vsel %vm644, %v622, 0
        %v655 = vsel %vm644, %v623, 0
        %v658 = vsel %vm644, %v624, 0
        %v661 = vsel %vm644, %v625, 0
        %v664 = vsel %vm644, %v626, 0
        %v667 = vsel %vm644, %v627, 0
        %v670 = vsel %vm644, %v636, 0
        %v673 = vsel %vm644, %v637, 0
        %v676 = vsel %vm644, %v638, 0
        %v679 = vsel %vm644, %v639, 0
        %v682 = vsel %vm644, %v640, 0
        %v685 = vsel %vm644, %v641, 0
        %v688 = vsel %vm644, %v642, 0
        %v691 = vsel %vm644, %v643, 0
        %vm693 = vcmask 1043456
        %v695 = vsel %vm693, %v572, 0
        %697 = vmatprep.subr.bf16.mxu0 0
        %698 = vmatpush1.bf16.msra.mxu0 %v695
        %699 = vmatprep.subr.bf16.mxu0 0
        %700 = vmatpush1.bf16.msra.mxu0 0
        %701 = vmatprep.subr.bf16.mxu0 0
        %702 = vmatpush1.bf16.msra.mxu0 0
        %703 = vmatprep.subr.bf16.mxu0 0
        %704 = vmatpush1.bf16.msra.mxu0 0
        %705 = vmatprep.subr.bf16.mxu0 0
        %706 = vmatpush1.bf16.msra.mxu0 0
        %707 = vmatprep.subr.bf16.mxu0 0
        %708 = vmatpush1.bf16.msra.mxu0 0
        %709 = vmatprep.subr.bf16.mxu0 0
        %710 = vmatpush1.bf16.msra.mxu0 0
        %711 = vmatprep.subr.bf16.mxu0 0
        %712 = vmatpush1.bf16.msra.mxu0 0
        %713 = vmatprep.subr.bf16.mxu0 0
        %714 = vmatpush1.bf16.msra.mxu0 0
        %715 = vmatprep.subr.bf16.mxu0 0
        %716 = vmatpush1.bf16.msra.mxu0 0
        %717 = vmatprep.subr.bf16.mxu0 0
        %718 = vmatpush1.bf16.msra.mxu0 0
        %719 = vmatprep.subr.bf16.mxu0 0
        %720 = vmatpush1.bf16.msra.mxu0 0
        %721 = vmatprep.subr.bf16.mxu0 0
        %722 = vmatpush1.bf16.msra.mxu0 0
        %723 = vmatprep.subr.bf16.mxu0 0
        %724 = vmatpush1.bf16.msra.mxu0 0
        %725 = vmatprep.subr.bf16.mxu0 0
        %726 = vmatpush1.bf16.msra.mxu0 0
        %727 = vmatprep.subr.bf16.mxu0 0
        %728 = vmatpush1.bf16.msra.mxu0 0
        %729 = vmatprep.mubr.bf16.mxu0 0
        %730 = vmatmul.mubr.bf16.gmra.mrb[0].mxu0 %v646
        %v731 = vpop.f32.mrb[0].mxu0
        %v732 = vadd.f32 0.0, %v731
        %v733 = vpop.f32.mrb[0].mxu0
        %v734 = vpop.f32.mrb[0].mxu0
        %v735 = vadd.f32 0.0, %v734
        %v736 = vpop.f32.mrb[0].mxu0
        %737 = vmatprep.mubr.bf16.mxu0 0
        %738 = vmatmul.mubr.bf16.gmra.mrb[0].mxu0 %v649
        %v739 = vpop.f32.mrb[0].mxu0
        %v740 = vadd.f32 0.0, %v739
        %v741 = vpop.f32.mrb[0].mxu0
        %v742 = vpop.f32.mrb[0].mxu0
        %v743 = vadd.f32 0.0, %v742
        %v744 = vpop.f32.mrb[0].mxu0
        %745 = vmatprep.mubr.bf16.mxu0 0
        %746 = vmatmul.mubr.bf16.gmra.mrb[0].mxu0 %v652
        %v747 = vpop.f32.mrb[0].mxu0
        %v748 = vadd.f32 0.0, %v747
        %v749 = vpop.f32.mrb[0].mxu0
        %v750 = vpop.f32.mrb[0].mxu0
        %v751 = vadd.f32 0.0, %v750
        %v752 = vpop.f32.mrb[0].mxu0
        %753 = vmatprep.mubr.bf16.mxu0 0
        %754 = vmatmul.mubr.bf16.gmra.mrb[0].mxu0 %v655
        %v755 = vpop.f32.mrb[0].mxu0
        %v756 = vadd.f32 0.0, %v755
        %v757 = vpop.f32.mrb[0].mxu0
        %v758 = vpop.f32.mrb[0].mxu0
        %v759 = vadd.f32 0.0, %v758
        %v760 = vpop.f32.mrb[0].mxu0
        %761 = vmatprep.mubr.bf16.mxu0 0
        %762 = vmatmul.mubr.bf16.gmra.mrb[0].mxu0 %v658
        %v763 = vpop.f32.mrb[0].mxu0
        %v764 = vadd.f32 0.0, %v763
        %v765 = vpop.f32.mrb[0].mxu0
        %v766 = vpop.f32.mrb[0].mxu0
        %v767 = vadd.f32 0.0, %v766
        %v768 = vpop.f32.mrb[0].mxu0
        %769 = vmatprep.mubr.bf16.mxu0 0
        %770 = vmatmul.mubr.bf16.gmra.mrb[0].mxu0 %v661
        %v771 = vpop.f32.mrb[0].mxu0
        %v772 = vadd.f32 0.0, %v771
        %v773 = vpop.f32.mrb[0].mxu0
        %v774 = vpop.f32.mrb[0].mxu0
        %v775 = vadd.f32 0.0, %v774
        %v776 = vpop.f32.mrb[0].mxu0
        %777 = vmatprep.mubr.bf16.mxu0 0
        %778 = vmatmul.mubr.bf16.gmra.mrb[0].mxu0 %v664
        %v779 = vpop.f32.mrb[0].mxu0
        %v780 = vadd.f32 0.0, %v779
        %v781 = vpop.f32.mrb[0].mxu0
        %v782 = vpop.f32.mrb[0].mxu0
        %v783 = vadd.f32 0.0, %v782
        %v784 = vpop.f32.mrb[0].mxu0
        %785 = vmatprep.mubr.bf16.mxu0 0
        %786 = vmatmul.mubr.bf16.gmra.mrb[0].mxu0 %v667
        %v787 = vpop.f32.mrb[0].mxu0
        %v788 = vadd.f32 0.0, %v787
        %v789 = vpop.f32.mrb[0].mxu0
        %v790 = vpop.f32.mrb[0].mxu0
        %v791 = vadd.f32 0.0, %v790
        %v792 = vpop.f32.mrb[0].mxu0
        %793 = vmatprep.mubr.bf16.mxu0 0
        %794 = vmatmul.mubr.bf16.gmra.mrb[0].mxu0 %v670
        %v795 = vpop.f32.mrb[0].mxu0
        %v796 = vadd.f32 0.0, %v795
        %v797 = vpop.f32.mrb[0].mxu0
        %v798 = vpop.f32.mrb[0].mxu0
        %v799 = vadd.f32 0.0, %v798
        %v800 = vpop.f32.mrb[0].mxu0
        %801 = vmatprep.mubr.bf16.mxu0 0
        %802 = vmatmul.mubr.bf16.gmra.mrb[0].mxu0 %v673
        %v803 = vpop.f32.mrb[0].mxu0
        %v804 = vadd.f32 0.0, %v803
        %v805 = vpop.f32.mrb[0].mxu0
        %v806 = vpop.f32.mrb[0].mxu0
        %v807 = vadd.f32 0.0, %v806
        %v808 = vpop.f32.mrb[0].mxu0
        %809 = vmatprep.mubr.bf16.mxu0 0
        %810 = vmatmul.mubr.bf16.gmra.mrb[0].mxu0 %v676
        %v811 = vpop.f32.mrb[0].mxu0
        %v812 = vadd.f32 0.0, %v811
        %v813 = vpop.f32.mrb[0].mxu0
        %v814 = vpop.f32.mrb[0].mxu0
        %v815 = vadd.f32 0.0, %v814
        %v816 = vpop.f32.mrb[0].mxu0
        %817 = vmatprep.mubr.bf16.mxu0 0
        %818 = vmatmul.mubr.bf16.gmra.mrb[0].mxu0 %v679
        %v819 = vpop.f32.mrb[0].mxu0
        %v820 = vadd.f32 0.0, %v819
        %v821 = vpop.f32.mrb[0].mxu0
        %v822 = vpop.f32.mrb[0].mxu0
        %v823 = vadd.f32 0.0, %v822
        %v824 = vpop.f32.mrb[0].mxu0
        %825 = vmatprep.mubr.bf16.mxu0 0
        %826 = vmatmul.mubr.bf16.gmra.mrb[0].mxu0 %v682
        %v827 = vpop.f32.mrb[0].mxu0
        %v828 = vadd.f32 0.0, %v827
        %v829 = vpop.f32.mrb[0].mxu0
        %v830 = vpop.f32.mrb[0].mxu0
        %v831 = vadd.f32 0.0, %v830
        %v832 = vpop.f32.mrb[0].mxu0
        %833 = vmatprep.mubr.bf16.mxu0 0
        %834 = vmatmul.mubr.bf16.gmra.mrb[0].mxu0 %v685
        %v835 = vpop.f32.mrb[0].mxu0
        %v836 = vadd.f32 0.0, %v835
        %v837 = vpop.f32.mrb[0].mxu0
        %v838 = vpop.f32.mrb[0].mxu0
        %v839 = vadd.f32 0.0, %v838
        %v840 = vpop.f32.mrb[0].mxu0
        %841 = vmatprep.mubr.bf16.mxu0 0
        %842 = vmatmul.mubr.bf16.gmra.mrb[0].mxu0 %v688
        %v843 = vpop.f32.mrb[0].mxu0
        %v844 = vadd.f32 0.0, %v843
        %v845 = vpop.f32.mrb[0].mxu0
        %v846 = vpop.f32.mrb[0].mxu0
        %v847 = vadd.f32 0.0, %v846
        %v848 = vpop.f32.mrb[0].mxu0
        %849 = vmatprep.mubr.bf16.mxu0 0
        %850 = vmatmul.mubr.bf16.gmra.mrb[0].mxu0 %v691
        %v851 = vpop.f32.mrb[0].mxu0
        %v852 = vadd.f32 0.0, %v851
        %v853 = vpop.f32.mrb[0].mxu0
        %v854 = vpop.f32.mrb[0].mxu0
        %v855 = vadd.f32 0.0, %v854
        %v856 = vpop.f32.mrb[0].mxu0
        %857 = vdwg.mxu0
        %v858 = vpack.c.b16 %v586, %v586
        %v859 = vpack.c.b16 %v587, %v587
        %862 = vxpose.xlu0.c.b16.start [1/8] %v858, 128
        %863 = vxpose.xlu0.c.b16.cont [2/8] 0, 128
        %864 = vxpose.xlu0.c.b16.cont [3/8] 0, 128
        %865 = vxpose.xlu0.c.b16.cont [4/8] 0, 128
        %866 = vxpose.xlu0.c.b16.cont [5/8] 0, 128
        %867 = vxpose.xlu0.c.b16.cont [6/8] 0, 128
        %868 = vxpose.xlu0.c.b16.cont [7/8] 0, 128
        %869 = vxpose.xlu0.c.b16.end [8/8] 0, 128
        %v870 = vpop.trf.xlu0
        %v871 = vpop.trf.xlu0
        %v872 = vpop.trf.xlu0
        %v873 = vpop.trf.xlu0
        %v874 = vpop.trf.xlu0
        %v875 = vpop.trf.xlu0
        %v876 = vpop.trf.xlu0
        %v877 = vpop.trf.xlu0
        %878 = vxpose.xlu0.c.b16.start [1/8] %v859, 128
        %879 = vxpose.xlu0.c.b16.cont [2/8] 0, 128
        %880 = vxpose.xlu0.c.b16.cont [3/8] 0, 128
        %881 = vxpose.xlu0.c.b16.cont [4/8] 0, 128
        %882 = vxpose.xlu0.c.b16.cont [5/8] 0, 128
        %883 = vxpose.xlu0.c.b16.cont [6/8] 0, 128
        %884 = vxpose.xlu0.c.b16.cont [7/8] 0, 128
        %885 = vxpose.xlu0.c.b16.end [8/8] 0, 128
        %v886 = vpop.trf.xlu0
        %v887 = vpop.trf.xlu0
        %v888 = vpop.trf.xlu0
        %v889 = vpop.trf.xlu0
        %v890 = vpop.trf.xlu0
        %v891 = vpop.trf.xlu0
        %v892 = vpop.trf.xlu0
        %v893 = vpop.trf.xlu0
        %v895 = vsel %vm644, %v870, 0
        %v898 = vsel %vm644, %v871, 0
        %v901 = vsel %vm644, %v872, 0
        %v904 = vsel %vm644, %v873, 0
        %v907 = vsel %vm644, %v874, 0
        %v910 = vsel %vm644, %v875, 0
        %v913 = vsel %vm644, %v876, 0
        %v916 = vsel %vm644, %v877, 0
        %v919 = vsel %vm644, %v886, 0
        %v922 = vsel %vm644, %v887, 0
        %v925 = vsel %vm644, %v888, 0
        %v928 = vsel %vm644, %v889, 0
        %v931 = vsel %vm644, %v890, 0
        %v934 = vsel %vm644, %v891, 0
        %v937 = vsel %vm644, %v892, 0
        %v940 = vsel %vm644, %v893, 0
        %v943 = vsel %vm693, %v573, 0
        %945 = vmatprep.subr.bf16.mxu0 0
        %946 = vmatpush1.bf16.msra.mxu0 %v943
        %947 = vmatprep.subr.bf16.mxu0 0
        %948 = vmatpush1.bf16.msra.mxu0 0
        %949 = vmatprep.subr.bf16.mxu0 0
        %950 = vmatpush1.bf16.msra.mxu0 0
        %951 = vmatprep.subr.bf16.mxu0 0
        %952 = vmatpush1.bf16.msra.mxu0 0
        %953 = vmatprep.subr.bf16.mxu0 0
        %954 = vmatpush1.bf16.msra.mxu0 0
        %955 = vmatprep.subr.bf16.mxu0 0
        %956 = vmatpush1.bf16.msra.mxu0 0
        %957 = vmatprep.subr.bf16.mxu0 0
        %958 = vmatpush1.bf16.msra.mxu0 0
        %959 = vmatprep.subr.bf16.mxu0 0
        %960 = vmatpush1.bf16.msra.mxu0 0
        %961 = vmatprep.subr.bf16.mxu0 0
        %962 = vmatpush1.bf16.msra.mxu0 0
        %963 = vmatprep.subr.bf16.mxu0 0
        %964 = vmatpush1.bf16.msra.mxu0 0
        %965 = vmatprep.subr.bf16.mxu0 0
        %966 = vmatpush1.bf16.msra.mxu0 0
        %967 = vmatprep.subr.bf16.mxu0 0
        %968 = vmatpush1.bf16.msra.mxu0 0
        %969 = vmatprep.subr.bf16.mxu0 0
        %970 = vmatpush1.bf16.msra.mxu0 0
        %971 = vmatprep.subr.bf16.mxu0 0
        %972 = vmatpush1.bf16.msra.mxu0 0
        %973 = vmatprep.subr.bf16.mxu0 0
        %974 = vmatpush1.bf16.msra.mxu0 0
        %975 = vmatprep.subr.bf16.mxu0 0
        %976 = vmatpush1.bf16.msra.mxu0 0
        %977 = vmatprep.mubr.bf16.mxu0 0
        %978 = vmatmul.mubr.bf16.gmra.mrb[0].mxu0 %v895
        %v979 = vpop.f32.mrb[0].mxu0
        %v980 = vadd.f32 0.0, %v979
        %v981 = vpop.f32.mrb[0].mxu0
        %v982 = vpop.f32.mrb[0].mxu0
        %v983 = vadd.f32 0.0, %v982
        %v984 = vpop.f32.mrb[0].mxu0
        %985 = vmatprep.mubr.bf16.mxu0 0
        %986 = vmatmul.mubr.bf16.gmra.mrb[0].mxu0 %v898
        %v987 = vpop.f32.mrb[0].mxu0
        %v988 = vadd.f32 0.0, %v987
        %v989 = vpop.f32.mrb[0].mxu0
        %v990 = vpop.f32.mrb[0].mxu0
        %v991 = vadd.f32 0.0, %v990
        %v992 = vpop.f32.mrb[0].mxu0
        %993 = vmatprep.mubr.bf16.mxu0 0
        %994 = vmatmul.mubr.bf16.gmra.mrb[0].mxu0 %v901
        %v995 = vpop.f32.mrb[0].mxu0
        %v996 = vadd.f32 0.0, %v995
        %v997 = vpop.f32.mrb[0].mxu0
        %v998 = vpop.f32.mrb[0].mxu0
        %v999 = vadd.f32 0.0, %v998
        %v1000 = vpop.f32.mrb[0].mxu0
        %1001 = vmatprep.mubr.bf16.mxu0 0
        %1002 = vmatmul.mubr.bf16.gmra.mrb[0].mxu0 %v904
        %v1003 = vpop.f32.mrb[0].mxu0
        %v1004 = vadd.f32 0.0, %v1003
        %v1005 = vpop.f32.mrb[0].mxu0
        %v1006 = vpop.f32.mrb[0].mxu0
        %v1007 = vadd.f32 0.0, %v1006
        %v1008 = vpop.f32.mrb[0].mxu0
        %1009 = vmatprep.mubr.bf16.mxu0 0
        %1010 = vmatmul.mubr.bf16.gmra.mrb[0].mxu0 %v907
        %v1011 = vpop.f32.mrb[0].mxu0
        %v1012 = vadd.f32 0.0, %v1011
        %v1013 = vpop.f32.mrb[0].mxu0
        %v1014 = vpop.f32.mrb[0].mxu0
        %v1015 = vadd.f32 0.0, %v1014
        %v1016 = vpop.f32.mrb[0].mxu0
        %1017 = vmatprep.mubr.bf16.mxu0 0
        %1018 = vmatmul.mubr.bf16.gmra.mrb[0].mxu0 %v910
        %v1019 = vpop.f32.mrb[0].mxu0
        %v1020 = vadd.f32 0.0, %v1019
        %v1021 = vpop.f32.mrb[0].mxu0
        %v1022 = vpop.f32.mrb[0].mxu0
        %v1023 = vadd.f32 0.0, %v1022
        %v1024 = vpop.f32.mrb[0].mxu0
        %1025 = vmatprep.mubr.bf16.mxu0 0
        %1026 = vmatmul.mubr.bf16.gmra.mrb[0].mxu0 %v913
        %v1027 = vpop.f32.mrb[0].mxu0
        %v1028 = vadd.f32 0.0, %v1027
        %v1029 = vpop.f32.mrb[0].mxu0
        %v1030 = vpop.f32.mrb[0].mxu0
        %v1031 = vadd.f32 0.0, %v1030
        %v1032 = vpop.f32.mrb[0].mxu0
        %1033 = vmatprep.mubr.bf16.mxu0 0
        %1034 = vmatmul.mubr.bf16.gmra.mrb[0].mxu0 %v916
        %v1035 = vpop.f32.mrb[0].mxu0
        %v1036 = vadd.f32 0.0, %v1035
        %v1037 = vpop.f32.mrb[0].mxu0
        %v1038 = vpop.f32.mrb[0].mxu0
        %v1039 = vadd.f32 0.0, %v1038
        %v1040 = vpop.f32.mrb[0].mxu0
        %1041 = vmatprep.mubr.bf16.mxu0 0
        %1042 = vmatmul.mubr.bf16.gmra.mrb[0].mxu0 %v919
        %v1043 = vpop.f32.mrb[0].mxu0
        %v1044 = vadd.f32 0.0, %v1043
        %v1045 = vpop.f32.mrb[0].mxu0
        %v1046 = vpop.f32.mrb[0].mxu0
        %v1047 = vadd.f32 0.0, %v1046
        %v1048 = vpop.f32.mrb[0].mxu0
        %1049 = vmatprep.mubr.bf16.mxu0 0
        %1050 = vmatmul.mubr.bf16.gmra.mrb[0].mxu0 %v922
        %v1051 = vpop.f32.mrb[0].mxu0
        %v1052 = vadd.f32 0.0, %v1051
        %v1053 = vpop.f32.mrb[0].mxu0
        %v1054 = vpop.f32.mrb[0].mxu0
        %v1055 = vadd.f32 0.0, %v1054
        %v1056 = vpop.f32.mrb[0].mxu0
        %1057 = vmatprep.mubr.bf16.mxu0 0
        %1058 = vmatmul.mubr.bf16.gmra.mrb[0].mxu0 %v925
        %v1059 = vpop.f32.mrb[0].mxu0
        %v1060 = vadd.f32 0.0, %v1059
        %v1061 = vpop.f32.mrb[0].mxu0
        %v1062 = vpop.f32.mrb[0].mxu0
        %v1063 = vadd.f32 0.0, %v1062
        %v1064 = vpop.f32.mrb[0].mxu0
        %1065 = vmatprep.mubr.bf16.mxu0 0
        %1066 = vmatmul.mubr.bf16.gmra.mrb[0].mxu0 %v928
        %v1067 = vpop.f32.mrb[0].mxu0
        %v1068 = vadd.f32 0.0, %v1067
        %v1069 = vpop.f32.mrb[0].mxu0
        %v1070 = vpop.f32.mrb[0].mxu0
        %v1071 = vadd.f32 0.0, %v1070
        %v1072 = vpop.f32.mrb[0].mxu0
        %1073 = vmatprep.mubr.bf16.mxu0 0
        %1074 = vmatmul.mubr.bf16.gmra.mrb[0].mxu0 %v931
        %v1075 = vpop.f32.mrb[0].mxu0
        %v1076 = vadd.f32 0.0, %v1075
        %v1077 = vpop.f32.mrb[0].mxu0
        %v1078 = vpop.f32.mrb[0].mxu0
        %v1079 = vadd.f32 0.0, %v1078
        %v1080 = vpop.f32.mrb[0].mxu0
        %1081 = vmatprep.mubr.bf16.mxu0 0
        %1082 = vmatmul.mubr.bf16.gmra.mrb[0].mxu0 %v934
        %v1083 = vpop.f32.mrb[0].mxu0
        %v1084 = vadd.f32 0.0, %v1083
        %v1085 = vpop.f32.mrb[0].mxu0
        %v1086 = vpop.f32.mrb[0].mxu0
        %v1087 = vadd.f32 0.0, %v1086
        %v1088 = vpop.f32.mrb[0].mxu0
        %1089 = vmatprep.mubr.bf16.mxu0 0
        %1090 = vmatmul.mubr.bf16.gmra.mrb[0].mxu0 %v937
        %v1091 = vpop.f32.mrb[0].mxu0
        %v1092 = vadd.f32 0.0, %v1091
        %v1093 = vpop.f32.mrb[0].mxu0
        %v1094 = vpop.f32.mrb[0].mxu0
        %v1095 = vadd.f32 0.0, %v1094
        %v1096 = vpop.f32.mrb[0].mxu0
        %1097 = vmatprep.mubr.bf16.mxu0 0
        %1098 = vmatmul.mubr.bf16.gmra.mrb[0].mxu0 %v940
        %v1099 = vpop.f32.mrb[0].mxu0
        %v1100 = vadd.f32 0.0, %v1099
        %v1101 = vpop.f32.mrb[0].mxu0
        %v1102 = vpop.f32.mrb[0].mxu0
        %v1103 = vadd.f32 0.0, %v1102
        %v1104 = vpop.f32.mrb[0].mxu0
        %1105 = vdwg.mxu0
        %v1106 = vpack.c.b16 %v588, %v588
        %v1107 = vpack.c.b16 %v589, %v589
        %1110 = vxpose.xlu0.c.b16.start [1/8] %v1106, 128
        %1111 = vxpose.xlu0.c.b16.cont [2/8] 0, 128
        %1112 = vxpose.xlu0.c.b16.cont [3/8] 0, 128
        %1113 = vxpose.xlu0.c.b16.cont [4/8] 0, 128
        %1114 = vxpose.xlu0.c.b16.cont [5/8] 0, 128
        %1115 = vxpose.xlu0.c.b16.cont [6/8] 0, 128
        %1116 = vxpose.xlu0.c.b16.cont [7/8] 0, 128
        %1117 = vxpose.xlu0.c.b16.end [8/8] 0, 128
        %v1118 = vpop.trf.xlu0
        %v1119 = vpop.trf.xlu0
        %v1120 = vpop.trf.xlu0
        %v1121 = vpop.trf.xlu0
        %v1122 = vpop.trf.xlu0
        %v1123 = vpop.trf.xlu0
        %v1124 = vpop.trf.xlu0
        %v1125 = vpop.trf.xlu0
        %1126 = vxpose.xlu0.c.b16.start [1/8] %v1107, 128
        %1127 = vxpose.xlu0.c.b16.cont [2/8] 0, 128
        %1128 = vxpose.xlu0.c.b16.cont [3/8] 0, 128
        %1129 = vxpose.xlu0.c.b16.cont [4/8] 0, 128
        %1130 = vxpose.xlu0.c.b16.cont [5/8] 0, 128
        %1131 = vxpose.xlu0.c.b16.cont [6/8] 0, 128
        %1132 = vxpose.xlu0.c.b16.cont [7/8] 0, 128
        %1133 = vxpose.xlu0.c.b16.end [8/8] 0, 128
        %v1134 = vpop.trf.xlu0
        %v1135 = vpop.trf.xlu0
        %v1136 = vpop.trf.xlu0
        %v1137 = vpop.trf.xlu0
        %v1138 = vpop.trf.xlu0
        %v1139 = vpop.trf.xlu0
        %v1140 = vpop.trf.xlu0
        %v1141 = vpop.trf.xlu0
        %v1143 = vsel %vm644, %v1118, 0
        %v1146 = vsel %vm644, %v1119, 0
        %v1149 = vsel %vm644, %v1120, 0
        %v1152 = vsel %vm644, %v1121, 0
        %v1155 = vsel %vm644, %v1122, 0
        %v1158 = vsel %vm644, %v1123, 0
        %v1161 = vsel %vm644, %v1124, 0
        %v1164 = vsel %vm644, %v1125, 0
        %v1167 = vsel %vm644, %v1134, 0
        %v1170 = vsel %vm644, %v1135, 0
        %v1173 = vsel %vm644, %v1136, 0
        %v1176 = vsel %vm644, %v1137, 0
        %v1179 = vsel %vm644, %v1138, 0
        %v1182 = vsel %vm644, %v1139, 0
        %v1185 = vsel %vm644, %v1140, 0
        %v1188 = vsel %vm644, %v1141, 0
        %v1191 = vsel %vm693, %v574, 0
        %1193 = vmatprep.subr.bf16.mxu0 0
        %1194 = vmatpush1.bf16.msra.mxu0 %v1191
        %1195 = vmatprep.subr.bf16.mxu0 0
        %1196 = vmatpush1.bf16.msra.mxu0 0
        %1197 = vmatprep.subr.bf16.mxu0 0
        %1198 = vmatpush1.bf16.msra.mxu0 0
        %1199 = vmatprep.subr.bf16.mxu0 0
        %1200 = vmatpush1.bf16.msra.mxu0 0
        %1201 = vmatprep.subr.bf16.mxu0 0
        %1202 = vmatpush1.bf16.msra.mxu0 0
        %1203 = vmatprep.subr.bf16.mxu0 0
        %1204 = vmatpush1.bf16.msra.mxu0 0
        %1205 = vmatprep.subr.bf16.mxu0 0
        %1206 = vmatpush1.bf16.msra.mxu0 0
        %1207 = vmatprep.subr.bf16.mxu0 0
        %1208 = vmatpush1.bf16.msra.mxu0 0
        %1209 = vmatprep.subr.bf16.mxu0 0
        %1210 = vmatpush1.bf16.msra.mxu0 0
        %1211 = vmatprep.subr.bf16.mxu0 0
        %1212 = vmatpush1.bf16.msra.mxu0 0
        %1213 = vmatprep.subr.bf16.mxu0 0
        %1214 = vmatpush1.bf16.msra.mxu0 0
        %1215 = vmatprep.subr.bf16.mxu0 0
        %1216 = vmatpush1.bf16.msra.mxu0 0
        %1217 = vmatprep.subr.bf16.mxu0 0
        %1218 = vmatpush1.bf16.msra.mxu0 0
        %1219 = vmatprep.subr.bf16.mxu0 0
        %1220 = vmatpush1.bf16.msra.mxu0 0
        %1221 = vmatprep.subr.bf16.mxu0 0
        %1222 = vmatpush1.bf16.msra.mxu0 0
        %1223 = vmatprep.subr.bf16.mxu0 0
        %1224 = vmatpush1.bf16.msra.mxu0 0
        %1225 = vmatprep.mubr.bf16.mxu0 0
        %1226 = vmatmul.mubr.bf16.gmra.mrb[0].mxu0 %v1143
        %v1227 = vpop.f32.mrb[0].mxu0
        %v1228 = vadd.f32 0.0, %v1227
        %v1229 = vpop.f32.mrb[0].mxu0
        %v1230 = vpop.f32.mrb[0].mxu0
        %v1231 = vadd.f32 0.0, %v1230
        %v1232 = vpop.f32.mrb[0].mxu0
        %1233 = vmatprep.mubr.bf16.mxu0 0
        %1234 = vmatmul.mubr.bf16.gmra.mrb[0].mxu0 %v1146
        %v1235 = vpop.f32.mrb[0].mxu0
        %v1236 = vadd.f32 0.0, %v1235
        %v1237 = vpop.f32.mrb[0].mxu0
        %v1238 = vpop.f32.mrb[0].mxu0
        %v1239 = vadd.f32 0.0, %v1238
        %v1240 = vpop.f32.mrb[0].mxu0
        %1241 = vmatprep.mubr.bf16.mxu0 0
        %1242 = vmatmul.mubr.bf16.gmra.mrb[0].mxu0 %v1149
        %v1243 = vpop.f32.mrb[0].mxu0
        %v1244 = vadd.f32 0.0, %v1243
        %v1245 = vpop.f32.mrb[0].mxu0
        %v1246 = vpop.f32.mrb[0].mxu0
        %v1247 = vadd.f32 0.0, %v1246
        %v1248 = vpop.f32.mrb[0].mxu0
        %1249 = vmatprep.mubr.bf16.mxu0 0
        %1250 = vmatmul.mubr.bf16.gmra.mrb[0].mxu0 %v1152
        %v1251 = vpop.f32.mrb[0].mxu0
        %v1252 = vadd.f32 0.0, %v1251
        %v1253 = vpop.f32.mrb[0].mxu0
        %v1254 = vpop.f32.mrb[0].mxu0
        %v1255 = vadd.f32 0.0, %v1254
        %v1256 = vpop.f32.mrb[0].mxu0
        %1257 = vmatprep.mubr.bf16.mxu0 0
        %1258 = vmatmul.mubr.bf16.gmra.mrb[0].mxu0 %v1155
        %v1259 = vpop.f32.mrb[0].mxu0
        %v1260 = vadd.f32 0.0, %v1259
        %v1261 = vpop.f32.mrb[0].mxu0
        %v1262 = vpop.f32.mrb[0].mxu0
        %v1263 = vadd.f32 0.0, %v1262
        %v1264 = vpop.f32.mrb[0].mxu0
        %1265 = vmatprep.mubr.bf16.mxu0 0
        %1266 = vmatmul.mubr.bf16.gmra.mrb[0].mxu0 %v1158
        %v1267 = vpop.f32.mrb[0].mxu0
        %v1268 = vadd.f32 0.0, %v1267
        %v1269 = vpop.f32.mrb[0].mxu0
        %v1270 = vpop.f32.mrb[0].mxu0
        %v1271 = vadd.f32 0.0, %v1270
        %v1272 = vpop.f32.mrb[0].mxu0
        %1273 = vmatprep.mubr.bf16.mxu0 0
        %1274 = vmatmul.mubr.bf16.gmra.mrb[0].mxu0 %v1161
        %v1275 = vpop.f32.mrb[0].mxu0
        %v1276 = vadd.f32 0.0, %v1275
        %v1277 = vpop.f32.mrb[0].mxu0
        %v1278 = vpop.f32.mrb[0].mxu0
        %v1279 = vadd.f32 0.0, %v1278
        %v1280 = vpop.f32.mrb[0].mxu0
        %1281 = vmatprep.mubr.bf16.mxu0 0
        %1282 = vmatmul.mubr.bf16.gmra.mrb[0].mxu0 %v1164
        %v1283 = vpop.f32.mrb[0].mxu0
        %v1284 = vadd.f32 0.0, %v1283
        %v1285 = vpop.f32.mrb[0].mxu0
        %v1286 = vpop.f32.mrb[0].mxu0
        %v1287 = vadd.f32 0.0, %v1286
        %v1288 = vpop.f32.mrb[0].mxu0
        %1289 = vmatprep.mubr.bf16.mxu0 0
        %1290 = vmatmul.mubr.bf16.gmra.mrb[0].mxu0 %v1167
        %v1291 = vpop.f32.mrb[0].mxu0
        %v1292 = vadd.f32 0.0, %v1291
        %v1293 = vpop.f32.mrb[0].mxu0
        %v1294 = vpop.f32.mrb[0].mxu0
        %v1295 = vadd.f32 0.0, %v1294
        %v1296 = vpop.f32.mrb[0].mxu0
        %1297 = vmatprep.mubr.bf16.mxu0 0
        %1298 = vmatmul.mubr.bf16.gmra.mrb[0].mxu0 %v1170
        %v1299 = vpop.f32.mrb[0].mxu0
        %v1300 = vadd.f32 0.0, %v1299
        %v1301 = vpop.f32.mrb[0].mxu0
        %v1302 = vpop.f32.mrb[0].mxu0
        %v1303 = vadd.f32 0.0, %v1302
        %v1304 = vpop.f32.mrb[0].mxu0
        %1305 = vmatprep.mubr.bf16.mxu0 0
        %1306 = vmatmul.mubr.bf16.gmra.mrb[0].mxu0 %v1173
        %v1307 = vpop.f32.mrb[0].mxu0
        %v1308 = vadd.f32 0.0, %v1307
        %v1309 = vpop.f32.mrb[0].mxu0
        %v1310 = vpop.f32.mrb[0].mxu0
        %v1311 = vadd.f32 0.0, %v1310
        %v1312 = vpop.f32.mrb[0].mxu0
        %1313 = vmatprep.mubr.bf16.mxu0 0
        %1314 = vmatmul.mubr.bf16.gmra.mrb[0].mxu0 %v1176
        %v1315 = vpop.f32.mrb[0].mxu0
        %v1316 = vadd.f32 0.0, %v1315
        %v1317 = vpop.f32.mrb[0].mxu0
        %v1318 = vpop.f32.mrb[0].mxu0
        %v1319 = vadd.f32 0.0, %v1318
        %v1320 = vpop.f32.mrb[0].mxu0
        %1321 = vmatprep.mubr.bf16.mxu0 0
        %1322 = vmatmul.mubr.bf16.gmra.mrb[0].mxu0 %v1179
        %v1323 = vpop.f32.mrb[0].mxu0
        %v1324 = vadd.f32 0.0, %v1323
        %v1325 = vpop.f32.mrb[0].mxu0
        %v1326 = vpop.f32.mrb[0].mxu0
        %v1327 = vadd.f32 0.0, %v1326
        %v1328 = vpop.f32.mrb[0].mxu0
        %1329 = vmatprep.mubr.bf16.mxu0 0
        %1330 = vmatmul.mubr.bf16.gmra.mrb[0].mxu0 %v1182
        %v1331 = vpop.f32.mrb[0].mxu0
        %v1332 = vadd.f32 0.0, %v1331
        %v1333 = vpop.f32.mrb[0].mxu0
        %v1334 = vpop.f32.mrb[0].mxu0
        %v1335 = vadd.f32 0.0, %v1334
        %v1336 = vpop.f32.mrb[0].mxu0
        %1337 = vmatprep.mubr.bf16.mxu0 0
        %1338 = vmatmul.mubr.bf16.gmra.mrb[0].mxu0 %v1185
        %v1339 = vpop.f32.mrb[0].mxu0
        %v1340 = vadd.f32 0.0, %v1339
        %v1341 = vpop.f32.mrb[0].mxu0
        %v1342 = vpop.f32.mrb[0].mxu0
        %v1343 = vadd.f32 0.0, %v1342
        %v1344 = vpop.f32.mrb[0].mxu0
        %1345 = vmatprep.mubr.bf16.mxu0 0
        %1346 = vmatmul.mubr.bf16.gmra.mrb[0].mxu0 %v1188
        %v1347 = vpop.f32.mrb[0].mxu0
        %v1348 = vadd.f32 0.0, %v1347
        %v1349 = vpop.f32.mrb[0].mxu0
        %v1350 = vpop.f32.mrb[0].mxu0
        %v1351 = vadd.f32 0.0, %v1350
        %v1352 = vpop.f32.mrb[0].mxu0
        %1353 = vdwg.mxu0
        %v1354 = vpack.c.b16 %v590, %v590
        %v1355 = vpack.c.b16 %v591, %v591
        %1358 = vxpose.xlu0.c.b16.start [1/8] %v1354, 128
        %1359 = vxpose.xlu0.c.b16.cont [2/8] 0, 128
        %1360 = vxpose.xlu0.c.b16.cont [3/8] 0, 128
        %1361 = vxpose.xlu0.c.b16.cont [4/8] 0, 128
        %1362 = vxpose.xlu0.c.b16.cont [5/8] 0, 128
        %1363 = vxpose.xlu0.c.b16.cont [6/8] 0, 128
        %1364 = vxpose.xlu0.c.b16.cont [7/8] 0, 128
        %1365 = vxpose.xlu0.c.b16.end [8/8] 0, 128
        %v1366 = vpop.trf.xlu0
        %v1367 = vpop.trf.xlu0
        %v1368 = vpop.trf.xlu0
        %v1369 = vpop.trf.xlu0
        %v1370 = vpop.trf.xlu0
        %v1371 = vpop.trf.xlu0
        %v1372 = vpop.trf.xlu0
        %v1373 = vpop.trf.xlu0
        %1374 = vxpose.xlu0.c.b16.start [1/8] %v1355, 128
        %1375 = vxpose.xlu0.c.b16.cont [2/8] 0, 128
        %1376 = vxpose.xlu0.c.b16.cont [3/8] 0, 128
        %1377 = vxpose.xlu0.c.b16.cont [4/8] 0, 128
        %1378 = vxpose.xlu0.c.b16.cont [5/8] 0, 128
        %1379 = vxpose.xlu0.c.b16.cont [6/8] 0, 128
        %1380 = vxpose.xlu0.c.b16.cont [7/8] 0, 128
        %1381 = vxpose.xlu0.c.b16.end [8/8] 0, 128
        %v1382 = vpop.trf.xlu0
        %v1383 = vpop.trf.xlu0
        %v1384 = vpop.trf.xlu0
        %v1385 = vpop.trf.xlu0
        %v1386 = vpop.trf.xlu0
        %v1387 = vpop.trf.xlu0
        %v1388 = vpop.trf.xlu0
        %v1389 = vpop.trf.xlu0
        %v1391 = vsel %vm644, %v1366, 0
        %v1394 = vsel %vm644, %v1367, 0
        %v1397 = vsel %vm644, %v1368, 0
        %v1400 = vsel %vm644, %v1369, 0
        %v1403 = vsel %vm644, %v1370, 0
        %v1406 = vsel %vm644, %v1371, 0
        %v1409 = vsel %vm644, %v1372, 0
        %v1412 = vsel %vm644, %v1373, 0
        %v1415 = vsel %vm644, %v1382, 0
        %v1418 = vsel %vm644, %v1383, 0
        %v1421 = vsel %vm644, %v1384, 0
        %v1424 = vsel %vm644, %v1385, 0
        %v1427 = vsel %vm644, %v1386, 0
        %v1430 = vsel %vm644, %v1387, 0
        %v1433 = vsel %vm644, %v1388, 0
        %v1436 = vsel %vm644, %v1389, 0
        %v1439 = vsel %vm693, %v575, 0
        %1441 = vmatprep.subr.bf16.mxu0 0
        %1442 = vmatpush1.bf16.msra.mxu0 %v1439
        %1443 = vmatprep.subr.bf16.mxu0 0
        %1444 = vmatpush1.bf16.msra.mxu0 0
        %1445 = vmatprep.subr.bf16.mxu0 0
        %1446 = vmatpush1.bf16.msra.mxu0 0
        %1447 = vmatprep.subr.bf16.mxu0 0
        %1448 = vmatpush1.bf16.msra.mxu0 0
        %1449 = vmatprep.subr.bf16.mxu0 0
        %1450 = vmatpush1.bf16.msra.mxu0 0
        %1451 = vmatprep.subr.bf16.mxu0 0
        %1452 = vmatpush1.bf16.msra.mxu0 0
        %1453 = vmatprep.subr.bf16.mxu0 0
        %1454 = vmatpush1.bf16.msra.mxu0 0
        %1455 = vmatprep.subr.bf16.mxu0 0
        %1456 = vmatpush1.bf16.msra.mxu0 0
        %1457 = vmatprep.subr.bf16.mxu0 0
        %1458 = vmatpush1.bf16.msra.mxu0 0
        %1459 = vmatprep.subr.bf16.mxu0 0
        %1460 = vmatpush1.bf16.msra.mxu0 0
        %1461 = vmatprep.subr.bf16.mxu0 0
        %1462 = vmatpush1.bf16.msra.mxu0 0
        %1463 = vmatprep.subr.bf16.mxu0 0
        %1464 = vmatpush1.bf16.msra.mxu0 0
        %1465 = vmatprep.subr.bf16.mxu0 0
        %1466 = vmatpush1.bf16.msra.mxu0 0
        %1467 = vmatprep.subr.bf16.mxu0 0
        %1468 = vmatpush1.bf16.msra.mxu0 0
        %1469 = vmatprep.subr.bf16.mxu0 0
        %1470 = vmatpush1.bf16.msra.mxu0 0
        %1471 = vmatprep.subr.bf16.mxu0 0
        %1472 = vmatpush1.bf16.msra.mxu0 0
        %1473 = vmatprep.mubr.bf16.mxu0 0
        %1474 = vmatmul.mubr.bf16.gmra.mrb[0].mxu0 %v1391
        %v1475 = vpop.f32.mrb[0].mxu0
        %v1476 = vadd.f32 0.0, %v1475
        %v1477 = vpop.f32.mrb[0].mxu0
        %v1478 = vpop.f32.mrb[0].mxu0
        %v1479 = vadd.f32 0.0, %v1478
        %v1480 = vpop.f32.mrb[0].mxu0
        %1481 = vmatprep.mubr.bf16.mxu0 0
        %1482 = vmatmul.mubr.bf16.gmra.mrb[0].mxu0 %v1394
        %v1483 = vpop.f32.mrb[0].mxu0
        %v1484 = vadd.f32 0.0, %v1483
        %v1485 = vpop.f32.mrb[0].mxu0
        %v1486 = vpop.f32.mrb[0].mxu0
        %v1487 = vadd.f32 0.0, %v1486
        %v1488 = vpop.f32.mrb[0].mxu0
        %1489 = vmatprep.mubr.bf16.mxu0 0
        %1490 = vmatmul.mubr.bf16.gmra.mrb[0].mxu0 %v1397
        %v1491 = vpop.f32.mrb[0].mxu0
        %v1492 = vadd.f32 0.0, %v1491
        %v1493 = vpop.f32.mrb[0].mxu0
        %v1494 = vpop.f32.mrb[0].mxu0
        %v1495 = vadd.f32 0.0, %v1494
        %v1496 = vpop.f32.mrb[0].mxu0
        %1497 = vmatprep.mubr.bf16.mxu0 0
        %1498 = vmatmul.mubr.bf16.gmra.mrb[0].mxu0 %v1400
        %v1499 = vpop.f32.mrb[0].mxu0
        %v1500 = vadd.f32 0.0, %v1499
        %v1501 = vpop.f32.mrb[0].mxu0
        %v1502 = vpop.f32.mrb[0].mxu0
        %v1503 = vadd.f32 0.0, %v1502
        %v1504 = vpop.f32.mrb[0].mxu0
        %1505 = vmatprep.mubr.bf16.mxu0 0
        %1506 = vmatmul.mubr.bf16.gmra.mrb[0].mxu0 %v1403
        %v1507 = vpop.f32.mrb[0].mxu0
        %v1508 = vadd.f32 0.0, %v1507
        %v1509 = vpop.f32.mrb[0].mxu0
        %v1510 = vpop.f32.mrb[0].mxu0
        %v1511 = vadd.f32 0.0, %v1510
        %v1512 = vpop.f32.mrb[0].mxu0
        %1513 = vmatprep.mubr.bf16.mxu0 0
        %1514 = vmatmul.mubr.bf16.gmra.mrb[0].mxu0 %v1406
        %v1515 = vpop.f32.mrb[0].mxu0
        %v1516 = vadd.f32 0.0, %v1515
        %v1517 = vpop.f32.mrb[0].mxu0
        %v1518 = vpop.f32.mrb[0].mxu0
        %v1519 = vadd.f32 0.0, %v1518
        %v1520 = vpop.f32.mrb[0].mxu0
        %1521 = vmatprep.mubr.bf16.mxu0 0
        %1522 = vmatmul.mubr.bf16.gmra.mrb[0].mxu0 %v1409
        %v1523 = vpop.f32.mrb[0].mxu0
        %v1524 = vadd.f32 0.0, %v1523
        %v1525 = vpop.f32.mrb[0].mxu0
        %v1526 = vpop.f32.mrb[0].mxu0
        %v1527 = vadd.f32 0.0, %v1526
        %v1528 = vpop.f32.mrb[0].mxu0
        %1529 = vmatprep.mubr.bf16.mxu0 0
        %1530 = vmatmul.mubr.bf16.gmra.mrb[0].mxu0 %v1412
        %v1531 = vpop.f32.mrb[0].mxu0
        %v1532 = vadd.f32 0.0, %v1531
        %v1533 = vpop.f32.mrb[0].mxu0
        %v1534 = vpop.f32.mrb[0].mxu0
        %v1535 = vadd.f32 0.0, %v1534
        %v1536 = vpop.f32.mrb[0].mxu0
        %1537 = vmatprep.mubr.bf16.mxu0 0
        %1538 = vmatmul.mubr.bf16.gmra.mrb[0].mxu0 %v1415
        %v1539 = vpop.f32.mrb[0].mxu0
        %v1540 = vadd.f32 0.0, %v1539
        %v1541 = vpop.f32.mrb[0].mxu0
        %v1542 = vpop.f32.mrb[0].mxu0
        %v1543 = vadd.f32 0.0, %v1542
        %v1544 = vpop.f32.mrb[0].mxu0
        %1545 = vmatprep.mubr.bf16.mxu0 0
        %1546 = vmatmul.mubr.bf16.gmra.mrb[0].mxu0 %v1418
        %v1547 = vpop.f32.mrb[0].mxu0
        %v1548 = vadd.f32 0.0, %v1547
        %v1549 = vpop.f32.mrb[0].mxu0
        %v1550 = vpop.f32.mrb[0].mxu0
        %v1551 = vadd.f32 0.0, %v1550
        %v1552 = vpop.f32.mrb[0].mxu0
        %1553 = vmatprep.mubr.bf16.mxu0 0
        %1554 = vmatmul.mubr.bf16.gmra.mrb[0].mxu0 %v1421
        %v1555 = vpop.f32.mrb[0].mxu0
        %v1556 = vadd.f32 0.0, %v1555
        %v1557 = vpop.f32.mrb[0].mxu0
        %v1558 = vpop.f32.mrb[0].mxu0
        %v1559 = vadd.f32 0.0, %v1558
        %v1560 = vpop.f32.mrb[0].mxu0
        %1561 = vmatprep.mubr.bf16.mxu0 0
        %1562 = vmatmul.mubr.bf16.gmra.mrb[0].mxu0 %v1424
        %v1563 = vpop.f32.mrb[0].mxu0
        %v1564 = vadd.f32 0.0, %v1563
        %v1565 = vpop.f32.mrb[0].mxu0
        %v1566 = vpop.f32.mrb[0].mxu0
        %v1567 = vadd.f32 0.0, %v1566
        %v1568 = vpop.f32.mrb[0].mxu0
        %1569 = vmatprep.mubr.bf16.mxu0 0
        %1570 = vmatmul.mubr.bf16.gmra.mrb[0].mxu0 %v1427
        %v1571 = vpop.f32.mrb[0].mxu0
        %v1572 = vadd.f32 0.0, %v1571
        %v1573 = vpop.f32.mrb[0].mxu0
        %v1574 = vpop.f32.mrb[0].mxu0
        %v1575 = vadd.f32 0.0, %v1574
        %v1576 = vpop.f32.mrb[0].mxu0
        %1577 = vmatprep.mubr.bf16.mxu0 0
        %1578 = vmatmul.mubr.bf16.gmra.mrb[0].mxu0 %v1430
        %v1579 = vpop.f32.mrb[0].mxu0
        %v1580 = vadd.f32 0.0, %v1579
        %v1581 = vpop.f32.mrb[0].mxu0
        %v1582 = vpop.f32.mrb[0].mxu0
        %v1583 = vadd.f32 0.0, %v1582
        %v1584 = vpop.f32.mrb[0].mxu0
        %1585 = vmatprep.mubr.bf16.mxu0 0
        %1586 = vmatmul.mubr.bf16.gmra.mrb[0].mxu0 %v1433
        %v1587 = vpop.f32.mrb[0].mxu0
        %v1588 = vadd.f32 0.0, %v1587
        %v1589 = vpop.f32.mrb[0].mxu0
        %v1590 = vpop.f32.mrb[0].mxu0
        %v1591 = vadd.f32 0.0, %v1590
        %v1592 = vpop.f32.mrb[0].mxu0
        %1593 = vmatprep.mubr.bf16.mxu0 0
        %1594 = vmatmul.mubr.bf16.gmra.mrb[0].mxu0 %v1436
        %v1595 = vpop.f32.mrb[0].mxu0
        %v1596 = vadd.f32 0.0, %v1595
        %v1597 = vpop.f32.mrb[0].mxu0
        %v1598 = vpop.f32.mrb[0].mxu0
        %v1599 = vadd.f32 0.0, %v1598
        %v1600 = vpop.f32.mrb[0].mxu0
        %1601 = vdwg.mxu0
        %v1602 = vmax.f32 %v732, %v735
        %v1603 = vmax.f32 %v1602, %v740
        %v1604 = vmax.f32 %v1603, %v743
        %v1605 = vmax.f32 %v1604, %v748
        %v1606 = vmax.f32 %v1605, %v751
        %v1607 = vmax.f32 %v1606, %v756
        %v1608 = vmax.f32 %v1607, %v759
        %v1609 = vmax.f32 %v1608, %v764
        %v1610 = vmax.f32 %v1609, %v767
        %v1611 = vmax.f32 %v1610, %v772
        %v1612 = vmax.f32 %v1611, %v775
        %v1613 = vmax.f32 %v1612, %v780
        %v1614 = vmax.f32 %v1613, %v783
        %v1615 = vmax.f32 %v1614, %v788
        %v1616 = vmax.f32 %v1615, %v791
        %v1617 = vmax.f32 %v1616, %v796
        %v1618 = vmax.f32 %v1617, %v799
        %v1619 = vmax.f32 %v1618, %v804
        %v1620 = vmax.f32 %v1619, %v807
        %v1621 = vmax.f32 %v1620, %v812
        %v1622 = vmax.f32 %v1621, %v815
        %v1623 = vmax.f32 %v1622, %v820
        %v1624 = vmax.f32 %v1623, %v823
        %v1625 = vmax.f32 %v1624, %v828
        %v1626 = vmax.f32 %v1625, %v831
        %v1627 = vmax.f32 %v1626, %v836
        %v1628 = vmax.f32 %v1627, %v839
        %v1629 = vmax.f32 %v1628, %v844
        %v1630 = vmax.f32 %v1629, %v847
        %v1631 = vmax.f32 %v1630, %v852
        %v1632 = vmax.f32 %v1631, %v855
        %v1633 = vrot.slane %v1632, 4
        %v1634 = vmax.f32 %v1632, %v1633
        %v1635 = vrot.slane %v1634, 2
        %v1636 = vmax.f32 %v1634, %v1635
        %v1637 = vrot.slane %v1636, 1
        %v1638 = vmax.f32 %v1636, %v1637
        %v1639 = vmax.f32 %v980, %v983
        %v1640 = vmax.f32 %v1639, %v988
        %v1641 = vmax.f32 %v1640, %v991
        %v1642 = vmax.f32 %v1641, %v996
        %v1643 = vmax.f32 %v1642, %v999
        %v1644 = vmax.f32 %v1643, %v1004
        %v1645 = vmax.f32 %v1644, %v1007
        %v1646 = vmax.f32 %v1645, %v1012
        %v1647 = vmax.f32 %v1646, %v1015
        %v1648 = vmax.f32 %v1647, %v1020
        %v1649 = vmax.f32 %v1648, %v1023
        %v1650 = vmax.f32 %v1649, %v1028
        %v1651 = vmax.f32 %v1650, %v1031
        %v1652 = vmax.f32 %v1651, %v1036
        %v1653 = vmax.f32 %v1652, %v1039
        %v1654 = vmax.f32 %v1653, %v1044
        %v1655 = vmax.f32 %v1654, %v1047
        %v1656 = vmax.f32 %v1655, %v1052
        %v1657 = vmax.f32 %v1656, %v1055
        %v1658 = vmax.f32 %v1657, %v1060
        %v1659 = vmax.f32 %v1658, %v1063
        %v1660 = vmax.f32 %v1659, %v1068
        %v1661 = vmax.f32 %v1660, %v1071
        %v1662 = vmax.f32 %v1661, %v1076
        %v1663 = vmax.f32 %v1662, %v1079
        %v1664 = vmax.f32 %v1663, %v1084
        %v1665 = vmax.f32 %v1664, %v1087
        %v1666 = vmax.f32 %v1665, %v1092
        %v1667 = vmax.f32 %v1666, %v1095
        %v1668 = vmax.f32 %v1667, %v1100
        %v1669 = vmax.f32 %v1668, %v1103
        %v1670 = vrot.slane %v1669, 4
        %v1671 = vmax.f32 %v1669, %v1670
        %v1672 = vrot.slane %v1671, 2
        %v1673 = vmax.f32 %v1671, %v1672
        %v1674 = vrot.slane %v1673, 1
        %v1675 = vmax.f32 %v1673, %v1674
        %v1676 = vmax.f32 %v1228, %v1231
        %v1677 = vmax.f32 %v1676, %v1236
        %v1678 = vmax.f32 %v1677, %v1239
        %v1679 = vmax.f32 %v1678, %v1244
        %v1680 = vmax.f32 %v1679, %v1247
        %v1681 = vmax.f32 %v1680, %v1252
        %v1682 = vmax.f32 %v1681, %v1255
        %v1683 = vmax.f32 %v1682, %v1260
        %v1684 = vmax.f32 %v1683, %v1263
        %v1685 = vmax.f32 %v1684, %v1268
        %v1686 = vmax.f32 %v1685, %v1271
        %v1687 = vmax.f32 %v1686, %v1276
        %v1688 = vmax.f32 %v1687, %v1279
        %v1689 = vmax.f32 %v1688, %v1284
        %v1690 = vmax.f32 %v1689, %v1287
        %v1691 = vmax.f32 %v1690, %v1292
        %v1692 = vmax.f32 %v1691, %v1295
        %v1693 = vmax.f32 %v1692, %v1300
        %v1694 = vmax.f32 %v1693, %v1303
        %v1695 = vmax.f32 %v1694, %v1308
        %v1696 = vmax.f32 %v1695, %v1311
        %v1697 = vmax.f32 %v1696, %v1316
        %v1698 = vmax.f32 %v1697, %v1319
        %v1699 = vmax.f32 %v1698, %v1324
        %v1700 = vmax.f32 %v1699, %v1327
        %v1701 = vmax.f32 %v1700, %v1332
        %v1702 = vmax.f32 %v1701, %v1335
        %v1703 = vmax.f32 %v1702, %v1340
        %v1704 = vmax.f32 %v1703, %v1343
        %v1705 = vmax.f32 %v1704, %v1348
        %v1706 = vmax.f32 %v1705, %v1351
        %v1707 = vrot.slane %v1706, 4
        %v1708 = vmax.f32 %v1706, %v1707
        %v1709 = vrot.slane %v1708, 2
        %v1710 = vmax.f32 %v1708, %v1709
        %v1711 = vrot.slane %v1710, 1
        %v1712 = vmax.f32 %v1710, %v1711
        %v1713 = vmax.f32 %v1476, %v1479
        %v1714 = vmax.f32 %v1713, %v1484
        %v1715 = vmax.f32 %v1714, %v1487
        %v1716 = vmax.f32 %v1715, %v1492
        %v1717 = vmax.f32 %v1716, %v1495
        %v1718 = vmax.f32 %v1717, %v1500
        %v1719 = vmax.f32 %v1718, %v1503
        %v1720 = vmax.f32 %v1719, %v1508
        %v1721 = vmax.f32 %v1720, %v1511
        %v1722 = vmax.f32 %v1721, %v1516
        %v1723 = vmax.f32 %v1722, %v1519
        %v1724 = vmax.f32 %v1723, %v1524
        %v1725 = vmax.f32 %v1724, %v1527
        %v1726 = vmax.f32 %v1725, %v1532
        %v1727 = vmax.f32 %v1726, %v1535
        %v1728 = vmax.f32 %v1727, %v1540
        %v1729 = vmax.f32 %v1728, %v1543
        %v1730 = vmax.f32 %v1729, %v1548
        %v1731 = vmax.f32 %v1730, %v1551
        %v1732 = vmax.f32 %v1731, %v1556
        %v1733 = vmax.f32 %v1732, %v1559
        %v1734 = vmax.f32 %v1733, %v1564
        %v1735 = vmax.f32 %v1734, %v1567
        %v1736 = vmax.f32 %v1735, %v1572
        %v1737 = vmax.f32 %v1736, %v1575
        %v1738 = vmax.f32 %v1737, %v1580
        %v1739 = vmax.f32 %v1738, %v1583
        %v1740 = vmax.f32 %v1739, %v1588
        %v1741 = vmax.f32 %v1740, %v1591
        %v1742 = vmax.f32 %v1741, %v1596
        %v1743 = vmax.f32 %v1742, %v1599
        %v1744 = vrot.slane %v1743, 4
        %v1745 = vmax.f32 %v1743, %v1744
        %v1746 = vrot.slane %v1745, 2
        %v1747 = vmax.f32 %v1745, %v1746
        %v1748 = vrot.slane %v1747, 1
        %v1749 = vmax.f32 %v1747, %v1748
        %v1750 = vsub.f32 %v732, %v1638
        %v1751 = vsub.f32 %v735, %v1638
        %v1752 = vsub.f32 %v740, %v1638
        %v1753 = vsub.f32 %v743, %v1638
        %v1754 = vsub.f32 %v748, %v1638
        %v1755 = vsub.f32 %v751, %v1638
        %v1756 = vsub.f32 %v756, %v1638
        %v1757 = vsub.f32 %v759, %v1638
        %v1758 = vsub.f32 %v764, %v1638
        %v1759 = vsub.f32 %v767, %v1638
        %v1760 = vsub.f32 %v772, %v1638
        %v1761 = vsub.f32 %v775, %v1638
        %v1762 = vsub.f32 %v780, %v1638
        %v1763 = vsub.f32 %v783, %v1638
        %v1764 = vsub.f32 %v788, %v1638
        %v1765 = vsub.f32 %v791, %v1638
        %v1766 = vsub.f32 %v796, %v1638
        %v1767 = vsub.f32 %v799, %v1638
        %v1768 = vsub.f32 %v804, %v1638
        %v1769 = vsub.f32 %v807, %v1638
        %v1770 = vsub.f32 %v812, %v1638
        %v1771 = vsub.f32 %v815, %v1638
        %v1772 = vsub.f32 %v820, %v1638
        %v1773 = vsub.f32 %v823, %v1638
        %v1774 = vsub.f32 %v828, %v1638
        %v1775 = vsub.f32 %v831, %v1638
        %v1776 = vsub.f32 %v836, %v1638
        %v1777 = vsub.f32 %v839, %v1638
        %v1778 = vsub.f32 %v844, %v1638
        %v1779 = vsub.f32 %v847, %v1638
        %v1780 = vsub.f32 %v852, %v1638
        %v1781 = vsub.f32 %v855, %v1638
        %v1782 = vsub.f32 %v980, %v1675
        %v1783 = vsub.f32 %v983, %v1675
        %v1784 = vsub.f32 %v988, %v1675
        %v1785 = vsub.f32 %v991, %v1675
        %v1786 = vsub.f32 %v996, %v1675
        %v1787 = vsub.f32 %v999, %v1675
        %v1788 = vsub.f32 %v1004, %v1675
        %v1789 = vsub.f32 %v1007, %v1675
        %v1790 = vsub.f32 %v1012, %v1675
        %v1791 = vsub.f32 %v1015, %v1675
        %v1792 = vsub.f32 %v1020, %v1675
        %v1793 = vsub.f32 %v1023, %v1675
        %v1794 = vsub.f32 %v1028, %v1675
        %v1795 = vsub.f32 %v1031, %v1675
        %v1796 = vsub.f32 %v1036, %v1675
        %v1797 = vsub.f32 %v1039, %v1675
        %v1798 = vsub.f32 %v1044, %v1675
        %v1799 = vsub.f32 %v1047, %v1675
        %v1800 = vsub.f32 %v1052, %v1675
        %v1801 = vsub.f32 %v1055, %v1675
        %v1802 = vsub.f32 %v1060, %v1675
        %v1803 = vsub.f32 %v1063, %v1675
        %v1804 = vsub.f32 %v1068, %v1675
        %v1805 = vsub.f32 %v1071, %v1675
        %v1806 = vsub.f32 %v1076, %v1675
        %v1807 = vsub.f32 %v1079, %v1675
        %v1808 = vsub.f32 %v1084, %v1675
        %v1809 = vsub.f32 %v1087, %v1675
        %v1810 = vsub.f32 %v1092, %v1675
        %v1811 = vsub.f32 %v1095, %v1675
        %v1812 = vsub.f32 %v1100, %v1675
        %v1813 = vsub.f32 %v1103, %v1675
        %v1814 = vsub.f32 %v1228, %v1712
        %v1815 = vsub.f32 %v1231, %v1712
        %v1816 = vsub.f32 %v1236, %v1712
        %v1817 = vsub.f32 %v1239, %v1712
        %v1818 = vsub.f32 %v1244, %v1712
        %v1819 = vsub.f32 %v1247, %v1712
        %v1820 = vsub.f32 %v1252, %v1712
        %v1821 = vsub.f32 %v1255, %v1712
        %v1822 = vsub.f32 %v1260, %v1712
        %v1823 = vsub.f32 %v1263, %v1712
        %v1824 = vsub.f32 %v1268, %v1712
        %v1825 = vsub.f32 %v1271, %v1712
        %v1826 = vsub.f32 %v1276, %v1712
        %v1827 = vsub.f32 %v1279, %v1712
        %v1828 = vsub.f32 %v1284, %v1712
        %v1829 = vsub.f32 %v1287, %v1712
        %v1830 = vsub.f32 %v1292, %v1712
        %v1831 = vsub.f32 %v1295, %v1712
        %v1832 = vsub.f32 %v1300, %v1712
        %v1833 = vsub.f32 %v1303, %v1712
        %v1834 = vsub.f32 %v1308, %v1712
        %v1835 = vsub.f32 %v1311, %v1712
        %v1836 = vsub.f32 %v1316, %v1712
        %v1837 = vsub.f32 %v1319, %v1712
        %v1838 = vsub.f32 %v1324, %v1712
        %v1839 = vsub.f32 %v1327, %v1712
        %v1840 = vsub.f32 %v1332, %v1712
        %v1841 = vsub.f32 %v1335, %v1712
        %v1842 = vsub.f32 %v1340, %v1712
        %v1843 = vsub.f32 %v1343, %v1712
        %v1844 = vsub.f32 %v1348, %v1712
        %v1845 = vsub.f32 %v1351, %v1712
        %v1846 = vsub.f32 %v1476, %v1749
        %v1847 = vsub.f32 %v1479, %v1749
        %v1848 = vsub.f32 %v1484, %v1749
        %v1849 = vsub.f32 %v1487, %v1749
        %v1850 = vsub.f32 %v1492, %v1749
        %v1851 = vsub.f32 %v1495, %v1749
        %v1852 = vsub.f32 %v1500, %v1749
        %v1853 = vsub.f32 %v1503, %v1749
        %v1854 = vsub.f32 %v1508, %v1749
        %v1855 = vsub.f32 %v1511, %v1749
        %v1856 = vsub.f32 %v1516, %v1749
        %v1857 = vsub.f32 %v1519, %v1749
        %v1858 = vsub.f32 %v1524, %v1749
        %v1859 = vsub.f32 %v1527, %v1749
        %v1860 = vsub.f32 %v1532, %v1749
        %v1861 = vsub.f32 %v1535, %v1749
        %v1862 = vsub.f32 %v1540, %v1749
        %v1863 = vsub.f32 %v1543, %v1749
        %v1864 = vsub.f32 %v1548, %v1749
        %v1865 = vsub.f32 %v1551, %v1749
        %v1866 = vsub.f32 %v1556, %v1749
        %v1867 = vsub.f32 %v1559, %v1749
        %v1868 = vsub.f32 %v1564, %v1749
        %v1869 = vsub.f32 %v1567, %v1749
        %v1870 = vsub.f32 %v1572, %v1749
        %v1871 = vsub.f32 %v1575, %v1749
        %v1872 = vsub.f32 %v1580, %v1749
        %v1873 = vsub.f32 %v1583, %v1749
        %v1874 = vsub.f32 %v1588, %v1749
        %v1875 = vsub.f32 %v1591, %v1749
        %v1876 = vsub.f32 %v1596, %v1749
        %v1877 = vsub.f32 %v1599, %v1749
        %v1878 = vmul.f32 %v1750, 1.442695
        %v1879 = vpow.pop %v1878
        %v1880 = vmul.f32 %v1751, 1.442695
        %v1881 = vpow.pop %v1880
        %v1882 = vmul.f32 %v1752, 1.442695
        %v1883 = vpow.pop %v1882
        %v1884 = vmul.f32 %v1753, 1.442695
        %v1885 = vpow.pop %v1884
        %v1886 = vmul.f32 %v1754, 1.442695
        %v1887 = vpow.pop %v1886
        %v1888 = vmul.f32 %v1755, 1.442695
        %v1889 = vpow.pop %v1888
        %v1890 = vmul.f32 %v1756, 1.442695
        %v1891 = vpow.pop %v1890
        %v1892 = vmul.f32 %v1757, 1.442695
        %v1893 = vpow.pop %v1892
        %v1894 = vmul.f32 %v1758, 1.442695
        %v1895 = vpow.pop %v1894
        %v1896 = vmul.f32 %v1759, 1.442695
        %v1897 = vpow.pop %v1896
        %v1898 = vmul.f32 %v1760, 1.442695
        %v1899 = vpow.pop %v1898
        %v1900 = vmul.f32 %v1761, 1.442695
        %v1901 = vpow.pop %v1900
        %v1902 = vmul.f32 %v1762, 1.442695
        %v1903 = vpow.pop %v1902
        %v1904 = vmul.f32 %v1763, 1.442695
        %v1905 = vpow.pop %v1904
        %v1906 = vmul.f32 %v1764, 1.442695
        %v1907 = vpow.pop %v1906
        %v1908 = vmul.f32 %v1765, 1.442695
        %v1909 = vpow.pop %v1908
        %v1910 = vmul.f32 %v1766, 1.442695
        %v1911 = vpow.pop %v1910
        %v1912 = vmul.f32 %v1767, 1.442695
        %v1913 = vpow.pop %v1912
        %v1914 = vmul.f32 %v1768, 1.442695
        %v1915 = vpow.pop %v1914
        %v1916 = vmul.f32 %v1769, 1.442695
        %v1917 = vpow.pop %v1916
        %v1918 = vmul.f32 %v1770, 1.442695
        %v1919 = vpow.pop %v1918
        %v1920 = vmul.f32 %v1771, 1.442695
        %v1921 = vpow.pop %v1920
        %v1922 = vmul.f32 %v1772, 1.442695
        %v1923 = vpow.pop %v1922
        %v1924 = vmul.f32 %v1773, 1.442695
        %v1925 = vpow.pop %v1924
        %v1926 = vmul.f32 %v1774, 1.442695
        %v1927 = vpow.pop %v1926
        %v1928 = vmul.f32 %v1775, 1.442695
        %v1929 = vpow.pop %v1928
        %v1930 = vmul.f32 %v1776, 1.442695
        %v1931 = vpow.pop %v1930
        %v1932 = vmul.f32 %v1777, 1.442695
        %v1933 = vpow.pop %v1932
        %v1934 = vmul.f32 %v1778, 1.442695
        %v1935 = vpow.pop %v1934
        %v1936 = vmul.f32 %v1779, 1.442695
        %v1937 = vpow.pop %v1936
        %v1938 = vmul.f32 %v1780, 1.442695
        %v1939 = vpow.pop %v1938
        %v1940 = vmul.f32 %v1781, 1.442695
        %v1941 = vpow.pop %v1940
        %v1942 = vmul.f32 %v1782, 1.442695
        %v1943 = vpow.pop %v1942
        %v1944 = vmul.f32 %v1783, 1.442695
        %v1945 = vpow.pop %v1944
        %v1946 = vmul.f32 %v1784, 1.442695
        %v1947 = vpow.pop %v1946
        %v1948 = vmul.f32 %v1785, 1.442695
        %v1949 = vpow.pop %v1948
        %v1950 = vmul.f32 %v1786, 1.442695
        %v1951 = vpow.pop %v1950
        %v1952 = vmul.f32 %v1787, 1.442695
        %v1953 = vpow.pop %v1952
        %v1954 = vmul.f32 %v1788, 1.442695
        %v1955 = vpow.pop %v1954
        %v1956 = vmul.f32 %v1789, 1.442695
        %v1957 = vpow.pop %v1956
        %v1958 = vmul.f32 %v1790, 1.442695
        %v1959 = vpow.pop %v1958
        %v1960 = vmul.f32 %v1791, 1.442695
        %v1961 = vpow.pop %v1960
        %v1962 = vmul.f32 %v1792, 1.442695
        %v1963 = vpow.pop %v1962
        %v1964 = vmul.f32 %v1793, 1.442695
        %v1965 = vpow.pop %v1964
        %v1966 = vmul.f32 %v1794, 1.442695
        %v1967 = vpow.pop %v1966
        %v1968 = vmul.f32 %v1795, 1.442695
        %v1969 = vpow.pop %v1968
        %v1970 = vmul.f32 %v1796, 1.442695
        %v1971 = vpow.pop %v1970
        %v1972 = vmul.f32 %v1797, 1.442695
        %v1973 = vpow.pop %v1972
        %v1974 = vmul.f32 %v1798, 1.442695
        %v1975 = vpow.pop %v1974
        %v1976 = vmul.f32 %v1799, 1.442695
        %v1977 = vpow.pop %v1976
        %v1978 = vmul.f32 %v1800, 1.442695
        %v1979 = vpow.pop %v1978
        %v1980 = vmul.f32 %v1801, 1.442695
        %v1981 = vpow.pop %v1980
        %v1982 = vmul.f32 %v1802, 1.442695
        %v1983 = vpow.pop %v1982
        %v1984 = vmul.f32 %v1803, 1.442695
        %v1985 = vpow.pop %v1984
        %v1986 = vmul.f32 %v1804, 1.442695
        %v1987 = vpow.pop %v1986
        %v1988 = vmul.f32 %v1805, 1.442695
        %v1989 = vpow.pop %v1988
        %v1990 = vmul.f32 %v1806, 1.442695
        %v1991 = vpow.pop %v1990
        %v1992 = vmul.f32 %v1807, 1.442695
        %v1993 = vpow.pop %v1992
        %v1994 = vmul.f32 %v1808, 1.442695
        %v1995 = vpow.pop %v1994
        %v1996 = vmul.f32 %v1809, 1.442695
        %v1997 = vpow.pop %v1996
        %v1998 = vmul.f32 %v1810, 1.442695
        %v1999 = vpow.pop %v1998
        %v2000 = vmul.f32 %v1811, 1.442695
        %v2001 = vpow.pop %v2000
        %v2002 = vmul.f32 %v1812, 1.442695
        %v2003 = vpow.pop %v2002
        %v2004 = vmul.f32 %v1813, 1.442695
        %v2005 = vpow.pop %v2004
        %v2006 = vmul.f32 %v1814, 1.442695
        %v2007 = vpow.pop %v2006
        %v2008 = vmul.f32 %v1815, 1.442695
        %v2009 = vpow.pop %v2008
        %v2010 = vmul.f32 %v1816, 1.442695
        %v2011 = vpow.pop %v2010
        %v2012 = vmul.f32 %v1817, 1.442695
        %v2013 = vpow.pop %v2012
        %v2014 = vmul.f32 %v1818, 1.442695
        %v2015 = vpow.pop %v2014
        %v2016 = vmul.f32 %v1819, 1.442695
        %v2017 = vpow.pop %v2016
        %v2018 = vmul.f32 %v1820, 1.442695
        %v2019 = vpow.pop %v2018
        %v2020 = vmul.f32 %v1821, 1.442695
        %v2021 = vpow.pop %v2020
        %v2022 = vmul.f32 %v1822, 1.442695
        %v2023 = vpow.pop %v2022
        %v2024 = vmul.f32 %v1823, 1.442695
        %v2025 = vpow.pop %v2024
        %v2026 = vmul.f32 %v1824, 1.442695
        %v2027 = vpow.pop %v2026
        %v2028 = vmul.f32 %v1825, 1.442695
        %v2029 = vpow.pop %v2028
        %v2030 = vmul.f32 %v1826, 1.442695
        %v2031 = vpow.pop %v2030
        %v2032 = vmul.f32 %v1827, 1.442695
        %v2033 = vpow.pop %v2032
        %v2034 = vmul.f32 %v1828, 1.442695
        %v2035 = vpow.pop %v2034
        %v2036 = vmul.f32 %v1829, 1.442695
        %v2037 = vpow.pop %v2036
        %v2038 = vmul.f32 %v1830, 1.442695
        %v2039 = vpow.pop %v2038
        %v2040 = vmul.f32 %v1831, 1.442695
        %v2041 = vpow.pop %v2040
        %v2042 = vmul.f32 %v1832, 1.442695
        %v2043 = vpow.pop %v2042
        %v2044 = vmul.f32 %v1833, 1.442695
        %v2045 = vpow.pop %v2044
        %v2046 = vmul.f32 %v1834, 1.442695
        %v2047 = vpow.pop %v2046
        %v2048 = vmul.f32 %v1835, 1.442695
        %v2049 = vpow.pop %v2048
        %v2050 = vmul.f32 %v1836, 1.442695
        %v2051 = vpow.pop %v2050
        %v2052 = vmul.f32 %v1837, 1.442695
        %v2053 = vpow.pop %v2052
        %v2054 = vmul.f32 %v1838, 1.442695
        %v2055 = vpow.pop %v2054
        %v2056 = vmul.f32 %v1839, 1.442695
        %v2057 = vpow.pop %v2056
        %v2058 = vmul.f32 %v1840, 1.442695
        %v2059 = vpow.pop %v2058
        %v2060 = vmul.f32 %v1841, 1.442695
        %v2061 = vpow.pop %v2060
        %v2062 = vmul.f32 %v1842, 1.442695
        %v2063 = vpow.pop %v2062
        %v2064 = vmul.f32 %v1843, 1.442695
        %v2065 = vpow.pop %v2064
        %v2066 = vmul.f32 %v1844, 1.442695
        %v2067 = vpow.pop %v2066
        %v2068 = vmul.f32 %v1845, 1.442695
        %v2069 = vpow.pop %v2068
        %v2070 = vmul.f32 %v1846, 1.442695
        %v2071 = vpow.pop %v2070
        %v2072 = vmul.f32 %v1847, 1.442695
        %v2073 = vpow.pop %v2072
        %v2074 = vmul.f32 %v1848, 1.442695
        %v2075 = vpow.pop %v2074
        %v2076 = vmul.f32 %v1849, 1.442695
        %v2077 = vpow.pop %v2076
        %v2078 = vmul.f32 %v1850, 1.442695
        %v2079 = vpow.pop %v2078
        %v2080 = vmul.f32 %v1851, 1.442695
        %v2081 = vpow.pop %v2080
        %v2082 = vmul.f32 %v1852, 1.442695
        %v2083 = vpow.pop %v2082
        %v2084 = vmul.f32 %v1853, 1.442695
        %v2085 = vpow.pop %v2084
        %v2086 = vmul.f32 %v1854, 1.442695
        %v2087 = vpow.pop %v2086
        %v2088 = vmul.f32 %v1855, 1.442695
        %v2089 = vpow.pop %v2088
        %v2090 = vmul.f32 %v1856, 1.442695
        %v2091 = vpow.pop %v2090
        %v2092 = vmul.f32 %v1857, 1.442695
        %v2093 = vpow.pop %v2092
        %v2094 = vmul.f32 %v1858, 1.442695
        %v2095 = vpow.pop %v2094
        %v2096 = vmul.f32 %v1859, 1.442695
        %v2097 = vpow.pop %v2096
        %v2098 = vmul.f32 %v1860, 1.442695
        %v2099 = vpow.pop %v2098
        %v2100 = vmul.f32 %v1861, 1.442695
        %v2101 = vpow.pop %v2100
        %v2102 = vmul.f32 %v1862, 1.442695
        %v2103 = vpow.pop %v2102
        %v2104 = vmul.f32 %v1863, 1.442695
        %v2105 = vpow.pop %v2104
        %v2106 = vmul.f32 %v1864, 1.442695
        %v2107 = vpow.pop %v2106
        %v2108 = vmul.f32 %v1865, 1.442695
        %v2109 = vpow.pop %v2108
        %v2110 = vmul.f32 %v1866, 1.442695
        %v2111 = vpow.pop %v2110
        %v2112 = vmul.f32 %v1867, 1.442695
        %v2113 = vpow.pop %v2112
        %v2114 = vmul.f32 %v1868, 1.442695
        %v2115 = vpow.pop %v2114
        %v2116 = vmul.f32 %v1869, 1.442695
        %v2117 = vpow.pop %v2116
        %v2118 = vmul.f32 %v1870, 1.442695
        %v2119 = vpow.pop %v2118
        %v2120 = vmul.f32 %v1871, 1.442695
        %v2121 = vpow.pop %v2120
        %v2122 = vmul.f32 %v1872, 1.442695
        %v2123 = vpow.pop %v2122
        %v2124 = vmul.f32 %v1873, 1.442695
        %v2125 = vpow.pop %v2124
        %v2126 = vmul.f32 %v1874, 1.442695
        %v2127 = vpow.pop %v2126
        %v2128 = vmul.f32 %v1875, 1.442695
        %v2129 = vpow.pop %v2128
        %v2130 = vmul.f32 %v1876, 1.442695
        %v2131 = vpow.pop %v2130
        %v2132 = vmul.f32 %v1877, 1.442695
        %v2133 = vpow.pop %v2132
        %v2134 = vadd.f32 %v1879, %v1881
        %v2135 = vadd.f32 %v2134, %v1883
        %v2136 = vadd.f32 %v2135, %v1885
        %v2137 = vadd.f32 %v2136, %v1887
        %v2138 = vadd.f32 %v2137, %v1889
        %v2139 = vadd.f32 %v2138, %v1891
        %v2140 = vadd.f32 %v2139, %v1893
        %v2141 = vadd.f32 %v2140, %v1895
        %v2142 = vadd.f32 %v2141, %v1897
        %v2143 = vadd.f32 %v2142, %v1899
        %v2144 = vadd.f32 %v2143, %v1901
        %v2145 = vadd.f32 %v2144, %v1903
        %v2146 = vadd.f32 %v2145, %v1905
        %v2147 = vadd.f32 %v2146, %v1907
        %v2148 = vadd.f32 %v2147, %v1909
        %v2149 = vadd.f32 %v2148, %v1911
        %v2150 = vadd.f32 %v2149, %v1913
        %v2151 = vadd.f32 %v2150, %v1915
        %v2152 = vadd.f32 %v2151, %v1917
        %v2153 = vadd.f32 %v2152, %v1919
        %v2154 = vadd.f32 %v2153, %v1921
        %v2155 = vadd.f32 %v2154, %v1923
        %v2156 = vadd.f32 %v2155, %v1925
        %v2157 = vadd.f32 %v2156, %v1927
        %v2158 = vadd.f32 %v2157, %v1929
        %v2159 = vadd.f32 %v2158, %v1931
        %v2160 = vadd.f32 %v2159, %v1933
        %v2161 = vadd.f32 %v2160, %v1935
        %v2162 = vadd.f32 %v2161, %v1937
        %v2163 = vadd.f32 %v2162, %v1939
        %v2164 = vadd.f32 %v2163, %v1941
        %v2165 = vrot.slane %v2164, 4
        %v2166 = vadd.f32 %v2164, %v2165
        %v2167 = vrot.slane %v2166, 2
        %v2168 = vadd.f32 %v2166, %v2167
        %v2169 = vrot.slane %v2168, 1
        %v2170 = vadd.f32 %v2168, %v2169
        %v2171 = vadd.f32 %v1943, %v1945
        %v2172 = vadd.f32 %v2171, %v1947
        %v2173 = vadd.f32 %v2172, %v1949
        %v2174 = vadd.f32 %v2173, %v1951
        %v2175 = vadd.f32 %v2174, %v1953
        %v2176 = vadd.f32 %v2175, %v1955
        %v2177 = vadd.f32 %v2176, %v1957
        %v2178 = vadd.f32 %v2177, %v1959
        %v2179 = vadd.f32 %v2178, %v1961
        %v2180 = vadd.f32 %v2179, %v1963
        %v2181 = vadd.f32 %v2180, %v1965
        %v2182 = vadd.f32 %v2181, %v1967
        %v2183 = vadd.f32 %v2182, %v1969
        %v2184 = vadd.f32 %v2183, %v1971
        %v2185 = vadd.f32 %v2184, %v1973
        %v2186 = vadd.f32 %v2185, %v1975
        %v2187 = vadd.f32 %v2186, %v1977
        %v2188 = vadd.f32 %v2187, %v1979
        %v2189 = vadd.f32 %v2188, %v1981
        %v2190 = vadd.f32 %v2189, %v1983
        %v2191 = vadd.f32 %v2190, %v1985
        %v2192 = vadd.f32 %v2191, %v1987
        %v2193 = vadd.f32 %v2192, %v1989
        %v2194 = vadd.f32 %v2193, %v1991
        %v2195 = vadd.f32 %v2194, %v1993
        %v2196 = vadd.f32 %v2195, %v1995
        %v2197 = vadd.f32 %v2196, %v1997
        %v2198 = vadd.f32 %v2197, %v1999
        %v2199 = vadd.f32 %v2198, %v2001
        %v2200 = vadd.f32 %v2199, %v2003
        %v2201 = vadd.f32 %v2200, %v2005
        %v2202 = vrot.slane %v2201, 4
        %v2203 = vadd.f32 %v2201, %v2202
        %v2204 = vrot.slane %v2203, 2
        %v2205 = vadd.f32 %v2203, %v2204
        %v2206 = vrot.slane %v2205, 1
        %v2207 = vadd.f32 %v2205, %v2206
        %v2208 = vadd.f32 %v2007, %v2009
        %v2209 = vadd.f32 %v2208, %v2011
        %v2210 = vadd.f32 %v2209, %v2013
        %v2211 = vadd.f32 %v2210, %v2015
        %v2212 = vadd.f32 %v2211, %v2017
        %v2213 = vadd.f32 %v2212, %v2019
        %v2214 = vadd.f32 %v2213, %v2021
        %v2215 = vadd.f32 %v2214, %v2023
        %v2216 = vadd.f32 %v2215, %v2025
        %v2217 = vadd.f32 %v2216, %v2027
        %v2218 = vadd.f32 %v2217, %v2029
        %v2219 = vadd.f32 %v2218, %v2031
        %v2220 = vadd.f32 %v2219, %v2033
        %v2221 = vadd.f32 %v2220, %v2035
        %v2222 = vadd.f32 %v2221, %v2037
        %v2223 = vadd.f32 %v2222, %v2039
        %v2224 = vadd.f32 %v2223, %v2041
        %v2225 = vadd.f32 %v2224, %v2043
        %v2226 = vadd.f32 %v2225, %v2045
        %v2227 = vadd.f32 %v2226, %v2047
        %v2228 = vadd.f32 %v2227, %v2049
        %v2229 = vadd.f32 %v2228, %v2051
        %v2230 = vadd.f32 %v2229, %v2053
        %v2231 = vadd.f32 %v2230, %v2055
        %v2232 = vadd.f32 %v2231, %v2057
        %v2233 = vadd.f32 %v2232, %v2059
        %v2234 = vadd.f32 %v2233, %v2061
        %v2235 = vadd.f32 %v2234, %v2063
        %v2236 = vadd.f32 %v2235, %v2065
        %v2237 = vadd.f32 %v2236, %v2067
        %v2238 = vadd.f32 %v2237, %v2069
        %v2239 = vrot.slane %v2238, 4
        %v2240 = vadd.f32 %v2238, %v2239
        %v2241 = vrot.slane %v2240, 2
        %v2242 = vadd.f32 %v2240, %v2241
        %v2243 = vrot.slane %v2242, 1
        %v2244 = vadd.f32 %v2242, %v2243
        %v2245 = vadd.f32 %v2071, %v2073
        %v2246 = vadd.f32 %v2245, %v2075
        %v2247 = vadd.f32 %v2246, %v2077
        %v2248 = vadd.f32 %v2247, %v2079
        %v2249 = vadd.f32 %v2248, %v2081
        %v2250 = vadd.f32 %v2249, %v2083
        %v2251 = vadd.f32 %v2250, %v2085
        %v2252 = vadd.f32 %v2251, %v2087
        %v2253 = vadd.f32 %v2252, %v2089
        %v2254 = vadd.f32 %v2253, %v2091
        %v2255 = vadd.f32 %v2254, %v2093
        %v2256 = vadd.f32 %v2255, %v2095
        %v2257 = vadd.f32 %v2256, %v2097
        %v2258 = vadd.f32 %v2257, %v2099
        %v2259 = vadd.f32 %v2258, %v2101
        %v2260 = vadd.f32 %v2259, %v2103
        %v2261 = vadd.f32 %v2260, %v2105
        %v2262 = vadd.f32 %v2261, %v2107
        %v2263 = vadd.f32 %v2262, %v2109
        %v2264 = vadd.f32 %v2263, %v2111
        %v2265 = vadd.f32 %v2264, %v2113
        %v2266 = vadd.f32 %v2265, %v2115
        %v2267 = vadd.f32 %v2266, %v2117
        %v2268 = vadd.f32 %v2267, %v2119
        %v2269 = vadd.f32 %v2268, %v2121
        %v2270 = vadd.f32 %v2269, %v2123
        %v2271 = vadd.f32 %v2270, %v2125
        %v2272 = vadd.f32 %v2271, %v2127
        %v2273 = vadd.f32 %v2272, %v2129
        %v2274 = vadd.f32 %v2273, %v2131
        %v2275 = vadd.f32 %v2274, %v2133
        %v2276 = vrot.slane %v2275, 4
        %v2277 = vadd.f32 %v2275, %v2276
        %v2278 = vrot.slane %v2277, 2
        %v2279 = vadd.f32 %v2277, %v2278
        %v2280 = vrot.slane %v2279, 1
        %v2281 = vadd.f32 %v2279, %v2280
        %v2282 = vrcp.pop %v2170
        %v2283 = vrcp.pop %v2207
        %v2284 = vrcp.pop %v2244
        %v2285 = vrcp.pop %v2281
        %v2286 = vmul.f32 %v1879, %v2282
        %v2287 = vmul.f32 %v1881, %v2282
        %v2288 = vmul.f32 %v1883, %v2282
        %v2289 = vmul.f32 %v1885, %v2282
        %v2290 = vmul.f32 %v1887, %v2282
        %v2291 = vmul.f32 %v1889, %v2282
        %v2292 = vmul.f32 %v1891, %v2282
        %v2293 = vmul.f32 %v1893, %v2282
        %v2294 = vmul.f32 %v1895, %v2282
        %v2295 = vmul.f32 %v1897, %v2282
        %v2296 = vmul.f32 %v1899, %v2282
        %v2297 = vmul.f32 %v1901, %v2282
        %v2298 = vmul.f32 %v1903, %v2282
        %v2299 = vmul.f32 %v1905, %v2282
        %v2300 = vmul.f32 %v1907, %v2282
        %v2301 = vmul.f32 %v1909, %v2282
        %v2302 = vmul.f32 %v1911, %v2282
        %v2303 = vmul.f32 %v1913, %v2282
        %v2304 = vmul.f32 %v1915, %v2282
        %v2305 = vmul.f32 %v1917, %v2282
        %v2306 = vmul.f32 %v1919, %v2282
        %v2307 = vmul.f32 %v1921, %v2282
        %v2308 = vmul.f32 %v1923, %v2282
        %v2309 = vmul.f32 %v1925, %v2282
        %v2310 = vmul.f32 %v1927, %v2282
        %v2311 = vmul.f32 %v1929, %v2282
        %v2312 = vmul.f32 %v1931, %v2282
        %v2313 = vmul.f32 %v1933, %v2282
        %v2314 = vmul.f32 %v1935, %v2282
        %v2315 = vmul.f32 %v1937, %v2282
        %v2316 = vmul.f32 %v1939, %v2282
        %v2317 = vmul.f32 %v1941, %v2282
        %v2318 = vmul.f32 %v1943, %v2283
        %v2319 = vmul.f32 %v1945, %v2283
        %v2320 = vmul.f32 %v1947, %v2283
        %v2321 = vmul.f32 %v1949, %v2283
        %v2322 = vmul.f32 %v1951, %v2283
        %v2323 = vmul.f32 %v1953, %v2283
        %v2324 = vmul.f32 %v1955, %v2283
        %v2325 = vmul.f32 %v1957, %v2283
        %v2326 = vmul.f32 %v1959, %v2283
        %v2327 = vmul.f32 %v1961, %v2283
        %v2328 = vmul.f32 %v1963, %v2283
        %v2329 = vmul.f32 %v1965, %v2283
        %v2330 = vmul.f32 %v1967, %v2283
        %v2331 = vmul.f32 %v1969, %v2283
        %v2332 = vmul.f32 %v1971, %v2283
        %v2333 = vmul.f32 %v1973, %v2283
        %v2334 = vmul.f32 %v1975, %v2283
        %v2335 = vmul.f32 %v1977, %v2283
        %v2336 = vmul.f32 %v1979, %v2283
        %v2337 = vmul.f32 %v1981, %v2283
        %v2338 = vmul.f32 %v1983, %v2283
        %v2339 = vmul.f32 %v1985, %v2283
        %v2340 = vmul.f32 %v1987, %v2283
        %v2341 = vmul.f32 %v1989, %v2283
        %v2342 = vmul.f32 %v1991, %v2283
        %v2343 = vmul.f32 %v1993, %v2283
        %v2344 = vmul.f32 %v1995, %v2283
        %v2345 = vmul.f32 %v1997, %v2283
        %v2346 = vmul.f32 %v1999, %v2283
        %v2347 = vmul.f32 %v2001, %v2283
        %v2348 = vmul.f32 %v2003, %v2283
        %v2349 = vmul.f32 %v2005, %v2283
        %v2350 = vmul.f32 %v2007, %v2284
        %v2351 = vmul.f32 %v2009, %v2284
        %v2352 = vmul.f32 %v2011, %v2284
        %v2353 = vmul.f32 %v2013, %v2284
        %v2354 = vmul.f32 %v2015, %v2284
        %v2355 = vmul.f32 %v2017, %v2284
        %v2356 = vmul.f32 %v2019, %v2284
        %v2357 = vmul.f32 %v2021, %v2284
        %v2358 = vmul.f32 %v2023, %v2284
        %v2359 = vmul.f32 %v2025, %v2284
        %v2360 = vmul.f32 %v2027, %v2284
        %v2361 = vmul.f32 %v2029, %v2284
        %v2362 = vmul.f32 %v2031, %v2284
        %v2363 = vmul.f32 %v2033, %v2284
        %v2364 = vmul.f32 %v2035, %v2284
        %v2365 = vmul.f32 %v2037, %v2284
        %v2366 = vmul.f32 %v2039, %v2284
        %v2367 = vmul.f32 %v2041, %v2284
        %v2368 = vmul.f32 %v2043, %v2284
        %v2369 = vmul.f32 %v2045, %v2284
        %v2370 = vmul.f32 %v2047, %v2284
        %v2371 = vmul.f32 %v2049, %v2284
        %v2372 = vmul.f32 %v2051, %v2284
        %v2373 = vmul.f32 %v2053, %v2284
        %v2374 = vmul.f32 %v2055, %v2284
        %v2375 = vmul.f32 %v2057, %v2284
        %v2376 = vmul.f32 %v2059, %v2284
        %v2377 = vmul.f32 %v2061, %v2284
        %v2378 = vmul.f32 %v2063, %v2284
        %v2379 = vmul.f32 %v2065, %v2284
        %v2380 = vmul.f32 %v2067, %v2284
        %v2381 = vmul.f32 %v2069, %v2284
        %v2382 = vmul.f32 %v2071, %v2285
        %v2383 = vmul.f32 %v2073, %v2285
        %v2384 = vmul.f32 %v2075, %v2285
        %v2385 = vmul.f32 %v2077, %v2285
        %v2386 = vmul.f32 %v2079, %v2285
        %v2387 = vmul.f32 %v2081, %v2285
        %v2388 = vmul.f32 %v2083, %v2285
        %v2389 = vmul.f32 %v2085, %v2285
        %v2390 = vmul.f32 %v2087, %v2285
        %v2391 = vmul.f32 %v2089, %v2285
        %v2392 = vmul.f32 %v2091, %v2285
        %v2393 = vmul.f32 %v2093, %v2285
        %v2394 = vmul.f32 %v2095, %v2285
        %v2395 = vmul.f32 %v2097, %v2285
        %v2396 = vmul.f32 %v2099, %v2285
        %v2397 = vmul.f32 %v2101, %v2285
        %v2398 = vmul.f32 %v2103, %v2285
        %v2399 = vmul.f32 %v2105, %v2285
        %v2400 = vmul.f32 %v2107, %v2285
        %v2401 = vmul.f32 %v2109, %v2285
        %v2402 = vmul.f32 %v2111, %v2285
        %v2403 = vmul.f32 %v2113, %v2285
        %v2404 = vmul.f32 %v2115, %v2285
        %v2405 = vmul.f32 %v2117, %v2285
        %v2406 = vmul.f32 %v2119, %v2285
        %v2407 = vmul.f32 %v2121, %v2285
        %v2408 = vmul.f32 %v2123, %v2285
        %v2409 = vmul.f32 %v2125, %v2285
        %v2410 = vmul.f32 %v2127, %v2285
        %v2411 = vmul.f32 %v2129, %v2285
        %v2412 = vmul.f32 %v2131, %v2285
        %v2413 = vmul.f32 %v2133, %v2285
        %v2414 = vpack.c.bf16 %v2287, %v2286
        %v2415 = vpack.c.bf16 %v2289, %v2288
        %v2416 = vpack.c.bf16 %v2291, %v2290
        %v2417 = vpack.c.bf16 %v2293, %v2292
        %v2418 = vpack.c.bf16 %v2295, %v2294
        %v2419 = vpack.c.bf16 %v2297, %v2296
        %v2420 = vpack.c.bf16 %v2299, %v2298
        %v2421 = vpack.c.bf16 %v2301, %v2300
        %v2422 = vpack.c.bf16 %v2303, %v2302
        %v2423 = vpack.c.bf16 %v2305, %v2304
        %v2424 = vpack.c.bf16 %v2307, %v2306
        %v2425 = vpack.c.bf16 %v2309, %v2308
        %v2426 = vpack.c.bf16 %v2311, %v2310
        %v2427 = vpack.c.bf16 %v2313, %v2312
        %v2428 = vpack.c.bf16 %v2315, %v2314
        %v2429 = vpack.c.bf16 %v2317, %v2316
        %v2430 = vpack.c.bf16 %v2319, %v2318
        %v2431 = vpack.c.bf16 %v2321, %v2320
        %v2432 = vpack.c.bf16 %v2323, %v2322
        %v2433 = vpack.c.bf16 %v2325, %v2324
        %v2434 = vpack.c.bf16 %v2327, %v2326
        %v2435 = vpack.c.bf16 %v2329, %v2328
        %v2436 = vpack.c.bf16 %v2331, %v2330
        %v2437 = vpack.c.bf16 %v2333, %v2332
        %v2438 = vpack.c.bf16 %v2335, %v2334
        %v2439 = vpack.c.bf16 %v2337, %v2336
        %v2440 = vpack.c.bf16 %v2339, %v2338
        %v2441 = vpack.c.bf16 %v2341, %v2340
        %v2442 = vpack.c.bf16 %v2343, %v2342
        %v2443 = vpack.c.bf16 %v2345, %v2344
        %v2444 = vpack.c.bf16 %v2347, %v2346
        %v2445 = vpack.c.bf16 %v2349, %v2348
        %v2446 = vpack.c.bf16 %v2351, %v2350
        %v2447 = vpack.c.bf16 %v2353, %v2352
        %v2448 = vpack.c.bf16 %v2355, %v2354
        %v2449 = vpack.c.bf16 %v2357, %v2356
        %v2450 = vpack.c.bf16 %v2359, %v2358
        %v2451 = vpack.c.bf16 %v2361, %v2360
        %v2452 = vpack.c.bf16 %v2363, %v2362
        %v2453 = vpack.c.bf16 %v2365, %v2364
        %v2454 = vpack.c.bf16 %v2367, %v2366
        %v2455 = vpack.c.bf16 %v2369, %v2368
        %v2456 = vpack.c.bf16 %v2371, %v2370
        %v2457 = vpack.c.bf16 %v2373, %v2372
        %v2458 = vpack.c.bf16 %v2375, %v2374
        %v2459 = vpack.c.bf16 %v2377, %v2376
        %v2460 = vpack.c.bf16 %v2379, %v2378
        %v2461 = vpack.c.bf16 %v2381, %v2380
        %v2462 = vpack.c.bf16 %v2383, %v2382
        %v2463 = vpack.c.bf16 %v2385, %v2384
        %v2464 = vpack.c.bf16 %v2387, %v2386
        %v2465 = vpack.c.bf16 %v2389, %v2388
        %v2466 = vpack.c.bf16 %v2391, %v2390
        %v2467 = vpack.c.bf16 %v2393, %v2392
        %v2468 = vpack.c.bf16 %v2395, %v2394
        %v2469 = vpack.c.bf16 %v2397, %v2396
        %v2470 = vpack.c.bf16 %v2399, %v2398
        %v2471 = vpack.c.bf16 %v2401, %v2400
        %v2472 = vpack.c.bf16 %v2403, %v2402
        %v2473 = vpack.c.bf16 %v2405, %v2404
        %v2474 = vpack.c.bf16 %v2407, %v2406
        %v2475 = vpack.c.bf16 %v2409, %v2408
        %v2476 = vpack.c.bf16 %v2411, %v2410
        %v2477 = vpack.c.bf16 %v2413, %v2412
        %v2478 = vpack.c.b16 %v600, %v600
        %v2479 = vpack.c.b16 %v601, %v601
        %2482 = vmatprep.subr.bf16.mxu0 0
        %2483 = vmatpush1.bf16.msra.mxu0 %v2414
        %2484 = vmatprep.subr.bf16.mxu0 0
        %2485 = vmatpush1.bf16.msra.mxu0 %v2415
        %2486 = vmatprep.subr.bf16.mxu0 0
        %2487 = vmatpush1.bf16.msra.mxu0 %v2416
        %2488 = vmatprep.subr.bf16.mxu0 0
        %2489 = vmatpush1.bf16.msra.mxu0 %v2417
        %2490 = vmatprep.subr.bf16.mxu0 0
        %2491 = vmatpush1.bf16.msra.mxu0 %v2418
        %2492 = vmatprep.subr.bf16.mxu0 0
        %2493 = vmatpush1.bf16.msra.mxu0 %v2419
        %2494 = vmatprep.subr.bf16.mxu0 0
        %2495 = vmatpush1.bf16.msra.mxu0 %v2420
        %2496 = vmatprep.subr.bf16.mxu0 0
        %2497 = vmatpush1.bf16.msra.mxu0 %v2421
        %2498 = vmatprep.subr.bf16.mxu0 0
        %2499 = vmatpush1.bf16.msra.mxu0 %v2422
        %2500 = vmatprep.subr.bf16.mxu0 0
        %2501 = vmatpush1.bf16.msra.mxu0 %v2423
        %2502 = vmatprep.subr.bf16.mxu0 0
        %2503 = vmatpush1.bf16.msra.mxu0 %v2424
        %2504 = vmatprep.subr.bf16.mxu0 0
        %2505 = vmatpush1.bf16.msra.mxu0 %v2425
        %2506 = vmatprep.subr.bf16.mxu0 0
        %2507 = vmatpush1.bf16.msra.mxu0 %v2426
        %2508 = vmatprep.subr.bf16.mxu0 0
        %2509 = vmatpush1.bf16.msra.mxu0 %v2427
        %2510 = vmatprep.subr.bf16.mxu0 0
        %2511 = vmatpush1.bf16.msra.mxu0 %v2428
        %2512 = vmatprep.subr.bf16.mxu0 0
        %2513 = vmatpush1.bf16.msra.mxu0 %v2429
        %2514 = vmatprep.mubr.bf16.mxu0 %v2479
        %2515 = vmatmul.mubr.bf16.gmra.mrb[0].mxu0 %v2478
        %v2516 = vpop.f32.mrb[0].mxu0
        %v2517 = vadd.f32 0.0, %v2516
        %v2518 = vpop.f32.mrb[0].mxu0
        %v2519 = vpop.f32.mrb[0].mxu0
        %v2520 = vpop.f32.mrb[0].mxu0
        %2521 = vdwg.mxu0
        %v2522 = vpack.c.b16 %v602, %v602
        %v2523 = vpack.c.b16 %v603, %v603
        %2526 = vmatprep.subr.bf16.mxu0 0
        %2527 = vmatpush1.bf16.msra.mxu0 %v2430
        %2528 = vmatprep.subr.bf16.mxu0 0
        %2529 = vmatpush1.bf16.msra.mxu0 %v2431
        %2530 = vmatprep.subr.bf16.mxu0 0
        %2531 = vmatpush1.bf16.msra.mxu0 %v2432
        %2532 = vmatprep.subr.bf16.mxu0 0
        %2533 = vmatpush1.bf16.msra.mxu0 %v2433
        %2534 = vmatprep.subr.bf16.mxu0 0
        %2535 = vmatpush1.bf16.msra.mxu0 %v2434
        %2536 = vmatprep.subr.bf16.mxu0 0
        %2537 = vmatpush1.bf16.msra.mxu0 %v2435
        %2538 = vmatprep.subr.bf16.mxu0 0
        %2539 = vmatpush1.bf16.msra.mxu0 %v2436
        %2540 = vmatprep.subr.bf16.mxu0 0
        %2541 = vmatpush1.bf16.msra.mxu0 %v2437
        %2542 = vmatprep.subr.bf16.mxu0 0
        %2543 = vmatpush1.bf16.msra.mxu0 %v2438
        %2544 = vmatprep.subr.bf16.mxu0 0
        %2545 = vmatpush1.bf16.msra.mxu0 %v2439
        %2546 = vmatprep.subr.bf16.mxu0 0
        %2547 = vmatpush1.bf16.msra.mxu0 %v2440
        %2548 = vmatprep.subr.bf16.mxu0 0
        %2549 = vmatpush1.bf16.msra.mxu0 %v2441
        %2550 = vmatprep.subr.bf16.mxu0 0
        %2551 = vmatpush1.bf16.msra.mxu0 %v2442
        %2552 = vmatprep.subr.bf16.mxu0 0
        %2553 = vmatpush1.bf16.msra.mxu0 %v2443
        %2554 = vmatprep.subr.bf16.mxu0 0
        %2555 = vmatpush1.bf16.msra.mxu0 %v2444
        %2556 = vmatprep.subr.bf16.mxu0 0
        %2557 = vmatpush1.bf16.msra.mxu0 %v2445
        %2558 = vmatprep.mubr.bf16.mxu0 %v2523
        %2559 = vmatmul.mubr.bf16.gmra.mrb[0].mxu0 %v2522
        %v2560 = vpop.f32.mrb[0].mxu0
        %v2561 = vadd.f32 0.0, %v2560
        %v2562 = vpop.f32.mrb[0].mxu0
        %v2563 = vpop.f32.mrb[0].mxu0
        %v2564 = vpop.f32.mrb[0].mxu0
        %2565 = vdwg.mxu0
        %v2566 = vpack.c.b16 %v604, %v604
        %v2567 = vpack.c.b16 %v605, %v605
        %2570 = vmatprep.subr.bf16.mxu0 0
        %2571 = vmatpush1.bf16.msra.mxu0 %v2446
        %2572 = vmatprep.subr.bf16.mxu0 0
        %2573 = vmatpush1.bf16.msra.mxu0 %v2447
        %2574 = vmatprep.subr.bf16.mxu0 0
        %2575 = vmatpush1.bf16.msra.mxu0 %v2448
        %2576 = vmatprep.subr.bf16.mxu0 0
        %2577 = vmatpush1.bf16.msra.mxu0 %v2449
        %2578 = vmatprep.subr.bf16.mxu0 0
        %2579 = vmatpush1.bf16.msra.mxu0 %v2450
        %2580 = vmatprep.subr.bf16.mxu0 0
        %2581 = vmatpush1.bf16.msra.mxu0 %v2451
        %2582 = vmatprep.subr.bf16.mxu0 0
        %2583 = vmatpush1.bf16.msra.mxu0 %v2452
        %2584 = vmatprep.subr.bf16.mxu0 0
        %2585 = vmatpush1.bf16.msra.mxu0 %v2453
        %2586 = vmatprep.subr.bf16.mxu0 0
        %2587 = vmatpush1.bf16.msra.mxu0 %v2454
        %2588 = vmatprep.subr.bf16.mxu0 0
        %2589 = vmatpush1.bf16.msra.mxu0 %v2455
        %2590 = vmatprep.subr.bf16.mxu0 0
        %2591 = vmatpush1.bf16.msra.mxu0 %v2456
        %2592 = vmatprep.subr.bf16.mxu0 0
        %2593 = vmatpush1.bf16.msra.mxu0 %v2457
        %2594 = vmatprep.subr.bf16.mxu0 0
        %2595 = vmatpush1.bf16.msra.mxu0 %v2458
        %2596 = vmatprep.subr.bf16.mxu0 0
        %2597 = vmatpush1.bf16.msra.mxu0 %v2459
        %2598 = vmatprep.subr.bf16.mxu0 0
        %2599 = vmatpush1.bf16.msra.mxu0 %v2460
        %2600 = vmatprep.subr.bf16.mxu0 0
        %2601 = vmatpush1.bf16.msra.mxu0 %v2461
        %2602 = vmatprep.mubr.bf16.mxu0 %v2567
        %2603 = vmatmul.mubr.bf16.gmra.mrb[0].mxu0 %v2566
        %v2604 = vpop.f32.mrb[0].mxu0
        %v2605 = vadd.f32 0.0, %v2604
        %v2606 = vpop.f32.mrb[0].mxu0
        %v2607 = vpop.f32.mrb[0].mxu0
        %v2608 = vpop.f32.mrb[0].mxu0
        %2609 = vdwg.mxu0
        %v2610 = vpack.c.b16 %v606, %v606
        %v2611 = vpack.c.b16 %v607, %v607
        %2614 = vmatprep.subr.bf16.mxu0 0
        %2615 = vmatpush1.bf16.msra.mxu0 %v2462
        %2616 = vmatprep.subr.bf16.mxu0 0
        %2617 = vmatpush1.bf16.msra.mxu0 %v2463
        %2618 = vmatprep.subr.bf16.mxu0 0
        %2619 = vmatpush1.bf16.msra.mxu0 %v2464
        %2620 = vmatprep.subr.bf16.mxu0 0
        %2621 = vmatpush1.bf16.msra.mxu0 %v2465
        %2622 = vmatprep.subr.bf16.mxu0 0
        %2623 = vmatpush1.bf16.msra.mxu0 %v2466
        %2624 = vmatprep.subr.bf16.mxu0 0
        %2625 = vmatpush1.bf16.msra.mxu0 %v2467
        %2626 = vmatprep.subr.bf16.mxu0 0
        %2627 = vmatpush1.bf16.msra.mxu0 %v2468
        %2628 = vmatprep.subr.bf16.mxu0 0
        %2629 = vmatpush1.bf16.msra.mxu0 %v2469
        %2630 = vmatprep.subr.bf16.mxu0 0
        %2631 = vmatpush1.bf16.msra.mxu0 %v2470
        %2632 = vmatprep.subr.bf16.mxu0 0
        %2633 = vmatpush1.bf16.msra.mxu0 %v2471
        %2634 = vmatprep.subr.bf16.mxu0 0
        %2635 = vmatpush1.bf16.msra.mxu0 %v2472
        %2636 = vmatprep.subr.bf16.mxu0 0
        %2637 = vmatpush1.bf16.msra.mxu0 %v2473
        %2638 = vmatprep.subr.bf16.mxu0 0
        %2639 = vmatpush1.bf16.msra.mxu0 %v2474
        %2640 = vmatprep.subr.bf16.mxu0 0
        %2641 = vmatpush1.bf16.msra.mxu0 %v2475
        %2642 = vmatprep.subr.bf16.mxu0 0
        %2643 = vmatpush1.bf16.msra.mxu0 %v2476
        %2644 = vmatprep.subr.bf16.mxu0 0
        %2645 = vmatpush1.bf16.msra.mxu0 %v2477
        %2646 = vmatprep.mubr.bf16.mxu0 %v2611
        %2647 = vmatmul.mubr.bf16.gmra.mrb[0].mxu0 %v2610
        %v2648 = vpop.f32.mrb[0].mxu0
        %v2649 = vadd.f32 0.0, %v2648
        %v2650 = vpop.f32.mrb[0].mxu0
        %v2651 = vpop.f32.mrb[0].mxu0
        %v2652 = vpop.f32.mrb[0].mxu0
        %2653 = vdwg.mxu0
        %v2654 = vpack.c.bf16 %v2561, %v2517
        %v2655 = vpack.c.bf16 %v2649, %v2605
        %v2656 = vld [vmem:[%s5] sm:$0xf]
        %v2657 = vld [vmem:[%s5 + $0x4] sm:$0xf]
        %v2658 = vld [vmem:[%s5 + $0x8] sm:$0xf]
        %v2659 = vld [vmem:[%s5 + $0xc] sm:$0xf]
        %v2660 = vld [vmem:[%s6] sm:$0xff]
        %v2661 = vld [vmem:[%s6 + $0x8] sm:$0xff]
        %v2662 = vld [vmem:[%s6 + $0x10] sm:$0xff]
        %v2663 = vld [vmem:[%s6 + $0x18] sm:$0xff]
        %2665 = vset.pattern.permute.xlu0 0
        %2666 = vperm.xlu0 %2665, %v2660
        %v2667 = vpop.permute.xlu0 %2666
        %2670 = vset.pattern.permute.xlu0 0
        %2671 = vperm.xlu0 %2670, %v2661
        %v2672 = vpop.permute.xlu0 %2671
        %2675 = vset.pattern.permute.xlu0 0
        %2676 = vperm.xlu0 %2675, %v2662
        %v2677 = vpop.permute.xlu0 %2676
        %2680 = vset.pattern.permute.xlu0 0
        %2681 = vperm.xlu0 %2680, %v2663
        %v2682 = vpop.permute.xlu0 %2681
        %v2688 = vunpack.c.l.b16 %v2656
        %v2689 = vunpack.c.l.b16 %v2657
        %v2690 = vunpack.c.l.b16 %v2658
        %v2691 = vunpack.c.l.b16 %v2659
        %v2692 = vpack.c.b16 %v2689, %v2688
        %v2693 = vpack.c.b16 %v2691, %v2690
        %v2695 = vsel %vm361, %v2692, 0
        %v2698 = vsel %vm361, %v2693, 0
        %2700 = vmatprep.subr.bf16.mxu0 0
        %2701 = vmatpush1.bf16.msra.mxu0 %v2654
        %2702 = vmatprep.subr.bf16.mxu0 0
        %2703 = vmatpush1.bf16.msra.mxu0 %v2655
        %2704 = vmatprep.subr.bf16.mxu0 0
        %2705 = vmatpush1.bf16.msra.mxu0 0
        %2706 = vmatprep.subr.bf16.mxu0 0
        %2707 = vmatpush1.bf16.msra.mxu0 0
        %2708 = vmatprep.subr.bf16.mxu0 0
        %2709 = vmatpush1.bf16.msra.mxu0 0
        %2710 = vmatprep.subr.bf16.mxu0 0
        %2711 = vmatpush1.bf16.msra.mxu0 0
        %2712 = vmatprep.subr.bf16.mxu0 0
        %2713 = vmatpush1.bf16.msra.mxu0 0
        %2714 = vmatprep.subr.bf16.mxu0 0
        %2715 = vmatpush1.bf16.msra.mxu0 0
        %2716 = vmatprep.subr.bf16.mxu0 0
        %2717 = vmatpush1.bf16.msra.mxu0 0
        %2718 = vmatprep.subr.bf16.mxu0 0
        %2719 = vmatpush1.bf16.msra.mxu0 0
        %2720 = vmatprep.subr.bf16.mxu0 0
        %2721 = vmatpush1.bf16.msra.mxu0 0
        %2722 = vmatprep.subr.bf16.mxu0 0
        %2723 = vmatpush1.bf16.msra.mxu0 0
        %2724 = vmatprep.subr.bf16.mxu0 0
        %2725 = vmatpush1.bf16.msra.mxu0 0
        %2726 = vmatprep.subr.bf16.mxu0 0
        %2727 = vmatpush1.bf16.msra.mxu0 0
        %2728 = vmatprep.subr.bf16.mxu0 0
        %2729 = vmatpush1.bf16.msra.mxu0 0
        %2730 = vmatprep.subr.bf16.mxu0 0
        %2731 = vmatpush1.bf16.msra.mxu0 0
        %2732 = vmatprep.mubr.bf16.mxu0 0
        %2733 = vmatmul.mubr.bf16.gmra.mrb[0].mxu0 %v2695
        %v2734 = vpop.f32.mrb[0].mxu0
        %v2735 = vadd.f32 %v2667, %v2734
        %v2736 = vpop.f32.mrb[0].mxu0
        %v2737 = vpop.f32.mrb[0].mxu0
        %v2738 = vadd.f32 %v2672, %v2737
        %v2739 = vpop.f32.mrb[0].mxu0
        %2740 = vmatprep.mubr.bf16.mxu0 0
        %2741 = vmatmul.mubr.bf16.gmra.mrb[0].mxu0 %v2698
        %v2742 = vpop.f32.mrb[0].mxu0
        %v2743 = vadd.f32 %v2677, %v2742
        %v2744 = vpop.f32.mrb[0].mxu0
        %v2745 = vpop.f32.mrb[0].mxu0
        %v2746 = vadd.f32 %v2682, %v2745
        %v2747 = vpop.f32.mrb[0].mxu0
        %2748 = vdwg.mxu0
        %2749 = vst [vmem:[%s328] sm:$0xff] %v2735
        %2750 = vst [vmem:[%s328 + $0x8] sm:$0xff] %v2738
        %2751 = vst [vmem:[%s328 + $0x10] sm:$0xff] %v2743
        %2752 = vst [vmem:[%s328 + $0x18] sm:$0xff] %v2746
        %s2753 = sand.u32 %s205, 1
        %s2754 = scalar_lea.sflag [#allocation4], %s2753
        %s2755 = sand.u32 %s205, 1
        %s2756 = smul.addr %s2755, 32
        %s2757 = scalar_lea.vmem [#allocation5], %s2756
        // Predicated region
        $region53: #{tpu_custom_call.1} parent=47 // pred_check
          %p2758 = pneg %p215
        $region54: #{tpu_custom_call.1} parent=47 // pred_check_branch
          %2760 = sbr.rel (%p2758) target = $region56
        $region55: #{tpu_custom_call.1} parent=47 // pred_region
          %s2762 = ssub.s32 512, 512
          %2763 = vsyncadd %s2754, %s2762
          %s2764 = smul.addr %s28, 8
          %s2765 = sadd.s32 %s29, %s2764
          %s2766 = smul.addr %s2765, 128
          %s2767 = scalar_lea.hbm %s7, %s2766
          %s2768 = sshll.u32 %s2757, 4
          %s2769 = int_to_ptr.vmem [resolvable:$true] %s2768
          %2774 = dma.vmem_to_hbm [thread:$0]  %s2769, 512, %s2767, %s2754, 128, 256, 8
        $region56: #{tpu_custom_call.1} parent=47 // pred_fallthru
          _
      $region48: #{tpu_custom_call.1} parent=5 // pred_fallthru
        _
      %p2775 = scmp.le.s32.totalorder 2, %s19
      // Predicated region
      $region57: #{tpu_custom_call.1} parent=5 // pred_check
        %p2776 = pneg %p2775
      $region58: #{tpu_custom_call.1} parent=5 // pred_check_branch
        %2778 = sbr.rel (%p2776) target = $region60
      $region59: #{tpu_custom_call.1} parent=5 // pred_region
        %s2779 = ssub.s32 %s19, 2
        // Predicated region
        $region61: #{tpu_custom_call.1} parent=59 // pred_check
          %p2780 = pneg %p221
        $region62: #{tpu_custom_call.1} parent=59 // pred_check_branch
          %2782 = sbr.rel (%p2780) target = $region64
        $region63: #{tpu_custom_call.1} parent=59 // pred_region
          %s2783 = sand.u32 %s206, 1
          %s2784 = scalar_lea.sflag [#allocation4], %s2783
          %s2785 = sand.u32 %s206, 1
          %s2786 = smul.addr %s2785, 32
          %s2787 = scalar_lea.vmem [#allocation5], %s2786
          %2788 = dma.done %s2784, 512
        $region64: #{tpu_custom_call.1} parent=59 // pred_fallthru
          _
      $region60: #{tpu_custom_call.1} parent=5 // pred_fallthru
        _
    $region6: #{tpu_custom_call.1} parent=1 // loop_footer
      %s23 = sadd.s32 1, %s19
    $region7: #{tpu_custom_call.1} parent=1 // loop_footer_branch
      %18 = sbr.rel target = $region3
    $region8: #{tpu_custom_call.1} parent=1 // loop_exit
      _
    %2789 = vsyncpa [#allocation3], 1
    %s2790 = scalar_lea.sflag [#allocation3], 1
    %2791 = vsyncpa %s2790, 1
    %2792 = vsyncpa [#allocation4], 1
    %s2793 = scalar_lea.sflag [#allocation4], 1
    %2794 = vsyncpa %s2793, 1

</llo_original>
